<compile_context>
chip_gen: v5e
topology: v5e:2x2
jax: 0.10.0
libtpu: 0.0.40
codegen_flags: <defaults>
</compile_context>

<pallas_src>
import functools

import jax
import jax.numpy as jnp
from jax.experimental import pallas as pl
from jax.experimental.pallas import tpu as pltpu

NUM_ATOM_TYPE = 120
NUM_CHIRALITY_TAG = 3
NUM_BOND_TYPE = 6
NUM_BOND_DIRECTION = 3
BN_EPS = 1e-5


def _round_up(x, m):
    return ((x + m - 1) // m) * m


def _pad_to(a, shape):
    pads = [(0, s - d) for d, s in zip(a.shape, shape)]
    return jnp.pad(a, pads)


# ----------------------------- Pallas kernel ------------------------------ #
def fused_gin_kernel(mask_ref, h0_ref, adj_ref, ebias_ref,
                     w1_ref, b1_ref, w2_ref, b2_ref, gamma_ref, beta_ref,
                     out_ref, *, inv_n, num_layers):
    """All GIN layers: A@h aggregation -> MLP -> BatchNorm1d (-> ReLU)."""
    l = pl.program_id(0)

    # Seed the resident node-feature buffer.  The output block's index_map is
    # constant over the layer axis, so it stays VMEM-resident across layers.
    @pl.when(l == 0)
    def _():
        out_ref[...] = h0_ref[...]

    h = out_ref[...]                                     # (N_pad, D_pad) f32

    # GIN aggregation (aggr='add', message = x_j + edge_attr):
    #   aggr[n] = sum_{e: tgt(e)=n} (h[src(e)] + eemb[e]) = (A @ h)[n] + edge_bias[n]
    # bf16 MXU operands, f32 accumulation.
    aggr = jnp.dot(adj_ref[...], h.astype(jnp.bfloat16),
                   preferred_element_type=jnp.float32)
    aggr = aggr + ebias_ref[0].astype(jnp.float32)

    # update(aggr) = mlp(aggr) = Linear(D, 2D) -> ReLU -> Linear(2D, D)
    h1 = jnp.dot(aggr.astype(jnp.bfloat16), w1_ref[0],
                 preferred_element_type=jnp.float32) + b1_ref[0]
    h1 = jnp.maximum(h1, 0.0)
    h2 = jnp.dot(h1.astype(jnp.bfloat16), w2_ref[0],
                 preferred_element_type=jnp.float32) + b2_ref[0]

    # BatchNorm1d, training-mode biased batch stats over the REAL nodes only.
    # Fused single masked pass: sum(x), sum(x^2); rsqrt goes to the EUP slot.
    mask = mask_ref[...]                                 # (N_pad, 1), 1 = real
    h2m = h2 * mask
    mean = jnp.sum(h2m, axis=0, keepdims=True) * inv_n
    ex2 = jnp.sum(h2m * h2, axis=0, keepdims=True) * inv_n
    var = ex2 - mean * mean
    hn = (h2 - mean) * jax.lax.rsqrt(var + BN_EPS) * gamma_ref[0] + beta_ref[0]

    # F.relu for all layers except the last (drop_ratio=0 -> dropout = identity).
    @pl.when(l < num_layers - 1)
    def _():
        out_ref[...] = jnp.maximum(hn, 0.0)

    @pl.when(l == num_layers - 1)
    def _():
        out_ref[...] = hn


# ------------------------------ parameter init ----------------------------- #
def xavier_uniform(key, shape):
    fan_in, fan_out = shape[0], shape[1]
    bound = (6.0 / (fan_in + fan_out)) ** 0.5
    return jax.random.uniform(key, shape, jnp.float32, -bound, bound)


def init_params(key, num_layer, emb_dim):
    keys = jax.random.split(key, 2 + 6 * num_layer)
    params = {
        "x_emb1": xavier_uniform(keys[0], (NUM_ATOM_TYPE, emb_dim)),
        "x_emb2": xavier_uniform(keys[1], (NUM_CHIRALITY_TAG, emb_dim)),
        "layers": [],
    }
    ki = 2
    for _ in range(num_layer):
        lin_scale = 0.01  # normal(0, 0.01) init for the GIN MLP linears
        layer = {
            "w1": lin_scale * jax.random.normal(keys[ki + 0], (emb_dim, 2 * emb_dim), jnp.float32),
            "b1": jnp.zeros((1, 2 * emb_dim), jnp.float32),
            "w2": lin_scale * jax.random.normal(keys[ki + 1], (2 * emb_dim, emb_dim), jnp.float32),
            "b2": jnp.zeros((1, emb_dim), jnp.float32),
            "edge_emb1": xavier_uniform(keys[ki + 2], (NUM_BOND_TYPE, emb_dim)),
            "edge_emb2": xavier_uniform(keys[ki + 3], (NUM_BOND_DIRECTION, emb_dim)),
            "bn_gamma": jnp.ones((1, emb_dim), jnp.float32),
            "bn_beta": jnp.zeros((1, emb_dim), jnp.float32),
        }
        ki += 6
        params["layers"].append(layer)
    return params


# ------------------------------- GNN forward ------------------------------- #
def gnn_forward(params, x, edge_index, edge_attr, *, num_layer, emb_dim):
    """x: (N, 2) int32 atom features; edge_index: (2, E) int32; edge_attr: (E, 2) int32."""
    num_nodes = x.shape[0]

    # node embedding (glue)
    h = (jnp.take(params["x_emb1"], x[:, 0], axis=0)
         + jnp.take(params["x_emb2"], x[:, 1], axis=0))

    # add self loops (appended at the end, as in torch_geometric.add_self_loops)
    loop_idx = jnp.arange(num_nodes, dtype=edge_index.dtype)
    ei = jnp.concatenate([edge_index, jnp.stack([loop_idx, loop_idx], axis=0)], axis=1)
    self_loop_attr = jnp.concatenate(
        [jnp.full((num_nodes, 1), 4, edge_attr.dtype),
         jnp.zeros((num_nodes, 1), edge_attr.dtype)], axis=1)
    ea = jnp.concatenate([edge_attr, self_loop_attr], axis=0)
    src = ei[0].astype(jnp.int32)
    tgt = ei[1].astype(jnp.int32)

    # padded sizes: lane-dense (128) feature and node dims.
    d_pad = _round_up(emb_dim, 128)
    h_pad = _round_up(2 * emb_dim, 128)
    n_pad = _round_up(num_nodes, 128)

    # Dense adjacency with edge multiplicities (incl. self-loops): A[t, s] = #edges s->t.
    # Counts are small integers -> exact in bf16.
    adj = (jnp.zeros((n_pad, n_pad), jnp.float32)
           .at[tgt, src].add(1.0)).astype(jnp.bfloat16)

    node_mask = jnp.zeros((n_pad, 1), jnp.float32).at[:num_nodes, 0].set(1.0)
    h0 = _pad_to(h.astype(jnp.float32), (n_pad, d_pad))

    # Per-layer stacks: edge bias (segment-summed edge embeddings) + padded weights.
    ebs, w1s, b1s, w2s, b2s, gms, bts = [], [], [], [], [], [], []
    for p in params["layers"]:
        ee = (jnp.take(p["edge_emb1"], ea[:, 0], axis=0)
              + jnp.take(p["edge_emb2"], ea[:, 1], axis=0)).astype(jnp.float32)
        eb = jax.ops.segment_sum(ee, tgt, num_segments=n_pad)          # (n_pad, emb_dim)
        ebs.append(_pad_to(eb, (n_pad, d_pad)).astype(jnp.bfloat16))
        w1s.append(_pad_to(p["w1"], (d_pad, h_pad)).astype(jnp.bfloat16))
        b1s.append(_pad_to(p["b1"], (1, h_pad)))
        w2s.append(_pad_to(p["w2"], (h_pad, d_pad)).astype(jnp.bfloat16))
        b2s.append(_pad_to(p["b2"], (1, d_pad)))
        gms.append(_pad_to(p["bn_gamma"], (1, d_pad)))   # padded gamma cols = 0
        bts.append(_pad_to(p["bn_beta"], (1, d_pad)))
    ebias = jnp.stack(ebs)
    w1 = jnp.stack(w1s); b1 = jnp.stack(b1s)
    w2 = jnp.stack(w2s); b2 = jnp.stack(b2s)
    gamma = jnp.stack(gms); beta = jnp.stack(bts)

    # explicit VMEM budget (double-buffered input blocks + resident output + headroom)
    f32b, bf16b = 4, 2
    blk_bytes = (n_pad * 1 * f32b                 # mask
                 + n_pad * d_pad * f32b           # h0
                 + n_pad * n_pad * bf16b          # adjacency
                 + n_pad * d_pad * bf16b          # edge bias[l]
                 + d_pad * h_pad * bf16b          # w1[l]
                 + h_pad * f32b                   # b1[l]
                 + h_pad * d_pad * bf16b          # w2[l]
                 + 3 * d_pad * f32b)              # b2, gamma, beta
    out_bytes = n_pad * d_pad * f32b
    vmem_limit = int(min(48 * 2**20, max(8 * 2**20, 4 * (2 * blk_bytes + out_bytes))))

    kernel = functools.partial(fused_gin_kernel,
                               inv_n=1.0 / float(num_nodes),
                               num_layers=num_layer)

    out_pad = pl.pallas_call(
        kernel,
        out_shape=jax.ShapeDtypeStruct((n_pad, d_pad), jnp.float32),
        grid_spec=pltpu.PrefetchScalarGridSpec(
            num_scalar_prefetch=0,
            grid=(num_layer,),
            in_specs=[
                pl.BlockSpec((n_pad, 1), lambda l: (0, 0)),            # node mask
                pl.BlockSpec((n_pad, d_pad), lambda l: (0, 0)),        # h0
                pl.BlockSpec((n_pad, n_pad), lambda l: (0, 0)),        # adjacency (bf16)
                pl.BlockSpec((1, n_pad, d_pad), lambda l: (l, 0, 0)),  # edge bias[l]
                pl.BlockSpec((1, d_pad, h_pad), lambda l: (l, 0, 0)),  # w1[l]
                pl.BlockSpec((1, 1, h_pad), lambda l: (l, 0, 0)),      # b1[l]
                pl.BlockSpec((1, h_pad, d_pad), lambda l: (l, 0, 0)),  # w2[l]
                pl.BlockSpec((1, 1, d_pad), lambda l: (l, 0, 0)),      # b2[l]
                pl.BlockSpec((1, 1, d_pad), lambda l: (l, 0, 0)),      # gamma[l]
                pl.BlockSpec((1, 1, d_pad), lambda l: (l, 0, 0)),      # beta[l]
            ],
            out_specs=pl.BlockSpec((n_pad, d_pad), lambda l: (0, 0)),  # resident h
        ),
        compiler_params=pltpu.CompilerParams(
            dimension_semantics=("arbitrary",),    # layers are sequential
            vmem_limit_bytes=vmem_limit),
    )(node_mask, h0, adj, ebias, w1, b1, w2, b2, gamma, beta)

    # JK == 'last'; drop padding
    return out_pad[:num_nodes, :emb_dim]


# ------------------------- pure-JAX reference check ------------------------ #
def gnn_reference(params, x, edge_index, edge_attr, *, num_layer, emb_dim):
    num_nodes = x.shape[0]
    h = (jnp.take(params["x_emb1"], x[:, 0], axis=0)
         + jnp.take(params["x_emb2"], x[:, 1], axis=0))
    loop_idx = jnp.arange(num_nodes, dtype=edge_index.dtype)
    ei = jnp.concatenate([edge_index, jnp.stack([loop_idx, loop_idx])], axis=1)
    ea = jnp.concatenate(
        [edge_attr,
         jnp.concatenate([jnp.full((num_nodes, 1), 4, edge_attr.dtype),
                          jnp.zeros((num_nodes, 1), edge_attr.dtype)], axis=1)], axis=0)
    src, tgt = ei[0], ei[1]
    for layer in range(num_layer):
        p = params["layers"][layer]
        eemb = (jnp.take(p["edge_emb1"], ea[:, 0], axis=0)
                + jnp.take(p["edge_emb2"], ea[:, 1], axis=0))
        msg = h[src] + eemb
        aggr = jax.ops.segment_sum(msg, tgt, num_segments=num_nodes)
        h1 = jnp.maximum(aggr @ p["w1"] + p["b1"], 0.0)
        h2 = h1 @ p["w2"] + p["b2"]
        mean = jnp.mean(h2, axis=0, keepdims=True)
        var = jnp.mean((h2 - mean) ** 2, axis=0, keepdims=True)
        hn = (h2 - mean) * jax.lax.rsqrt(var + BN_EPS) * p["bn_gamma"] + p["bn_beta"]
        if layer != num_layer - 1:
            hn = jnp.maximum(hn, 0.0)
        h = hn
    return h


# ----------------------------------- main ----------------------------------- #
if __name__ == "__main__":
    num_layer = 2
    emb_dim = 32
    num_nodes = 16
    num_edges = 24

    key = jax.random.PRNGKey(0)
    k_param, k_x0, k_x1, k_ei, k_ea0, k_ea1 = jax.random.split(key, 6)

    params = init_params(k_param, num_layer, emb_dim)

    x = jnp.stack(
        [jax.random.randint(k_x0, (num_nodes,), 0, NUM_ATOM_TYPE),
         jax.random.randint(k_x1, (num_nodes,), 0, NUM_CHIRALITY_TAG)], axis=1
    ).astype(jnp.int32)
    edge_index = jax.random.randint(k_ei, (2, num_edges), 0, num_nodes).astype(jnp.int32)
    edge_attr = jnp.stack(
        [jax.random.randint(k_ea0, (num_edges,), 0, NUM_BOND_TYPE),
         jax.random.randint(k_ea1, (num_edges,), 0, NUM_BOND_DIRECTION)], axis=1
    ).astype(jnp.int32)

    out = gnn_forward(params, x, edge_index, edge_attr,
                      num_layer=num_layer, emb_dim=emb_dim)
    out = jax.block_until_ready(out)

    ref = gnn_reference(params, x, edge_index, edge_attr,
                        num_layer=num_layer, emb_dim=emb_dim)
    assert out.shape == (num_nodes, emb_dim)
    # Tolerance accounts for bf16 MXU operands (f32 accumulation) vs the f32 reference.
    assert jnp.allclose(out, ref, atol=5e-2, rtol=5e-2), "Pallas output mismatch vs reference"

    print("KERNEL_OK")
</pallas_src>

<mosaic_0001>
module attributes {stable_mosaic.version = 11 : i64} {
  func.func @fused_gin_kernel(%arg0: i32, %arg1: memref<128x1xf32, #tpu.memory_space<vmem>>, %arg2: memref<128x128xf32, #tpu.memory_space<vmem>>, %arg3: memref<128x128xbf16, #tpu.memory_space<vmem>>, %arg4: memref<1x128x128xbf16, #tpu.memory_space<vmem>>, %arg5: memref<1x128x128xbf16, #tpu.memory_space<vmem>>, %arg6: memref<1x1x128xf32, #tpu.memory_space<vmem>>, %arg7: memref<1x128x128xbf16, #tpu.memory_space<vmem>>, %arg8: memref<1x1x128xf32, #tpu.memory_space<vmem>>, %arg9: memref<1x1x128xf32, #tpu.memory_space<vmem>>, %arg10: memref<1x1x128xf32, #tpu.memory_space<vmem>>, %arg11: memref<128x128xf32, #tpu.memory_space<vmem>>) attributes {dimension_semantics = [#tpu.dimension_semantics<arbitrary>], iteration_bounds = array<i64: 2>, scalar_prefetch = 0 : i64, scratch_operands = 0 : i64, tpu.core_type = #tpu.core_type<tc>, window_params = [{pipeline_mode = #tpu.pipeline_mode<synchronous>, transform_indices = @transform_0, window_bounds = array<i64: 128, 1>}, {pipeline_mode = #tpu.pipeline_mode<synchronous>, transform_indices = @transform_1, window_bounds = array<i64: 128, 128>}, {pipeline_mode = #tpu.pipeline_mode<synchronous>, transform_indices = @transform_2, window_bounds = array<i64: 128, 128>}, {transform_indices = @transform_3, window_bounds = array<i64: 1, 128, 128>}, {transform_indices = @transform_4, window_bounds = array<i64: 1, 128, 128>}, {transform_indices = @transform_5, window_bounds = array<i64: 1, 1, 128>}, {transform_indices = @transform_6, window_bounds = array<i64: 1, 128, 128>}, {transform_indices = @transform_7, window_bounds = array<i64: 1, 1, 128>}, {transform_indices = @transform_8, window_bounds = array<i64: 1, 1, 128>}, {transform_indices = @transform_9, window_bounds = array<i64: 1, 1, 128>}, {pipeline_mode = #tpu.pipeline_mode<synchronous>, transform_indices = @transform_10, window_bounds = array<i64: 128, 128>}]} {
    %c0_i32 = arith.constant 0 : i32
    %0 = arith.cmpi eq, %arg0, %c0_i32 : i32
    %1 = arith.extui %0 : i1 to i32
    %c0_i32_0 = arith.constant 0 : i32
    %2 = arith.cmpi ne, %1, %c0_i32_0 : i32
    scf.if %2 {
      %c0_38 = arith.constant 0 : index
      %c0_39 = arith.constant 0 : index
      %64 = vector.load %arg2[%c0_38, %c0_39] : memref<128x128xf32, #tpu.memory_space<vmem>>, vector<128x128xf32>
      %c0_40 = arith.constant 0 : index
      %c0_41 = arith.constant 0 : index
      %65 = vector.load %arg11[%c0_40, %c0_41] : memref<128x128xf32, #tpu.memory_space<vmem>>, vector<128x128xf32>
      tpu.vector_store %arg11[%c0_40, %c0_41], %64 {strides = array<i32>} : memref<128x128xf32, #tpu.memory_space<vmem>>, vector<128x128xf32>,
    } else {
    }
    %c0 = arith.constant 0 : index
    %c0_1 = arith.constant 0 : index
    %3 = vector.load %arg11[%c0, %c0_1] : memref<128x128xf32, #tpu.memory_space<vmem>>, vector<128x128xf32>
    %c0_2 = arith.constant 0 : index
    %c0_3 = arith.constant 0 : index
    %4 = vector.load %arg3[%c0_2, %c0_3] : memref<128x128xbf16, #tpu.memory_space<vmem>>, vector<128x128xbf16>
    %5 = arith.truncf %3 : vector<128x128xf32> to vector<128x128xbf16>
    %cst = arith.constant dense<0.000000e+00> : vector<128x128xf32>
    %6 = tpu.matmul %4, %5, %cst {dimension_numbers = #tpu.dot_dimension_numbers<[1], [0], [0], [1], [0, 0, 1, 1], [], []>} : vector<128x128xbf16>, vector<128x128xbf16>, vector<128x128xf32> -> vector<128x128xf32>
    %c0_4 = arith.constant 0 : index
    %c0_5 = arith.constant 0 : index
    %c0_6 = arith.constant 0 : index
    %7 = vector.load %arg4[%c0_4, %c0_5, %c0_6] : memref<1x128x128xbf16, #tpu.memory_space<vmem>>, vector<1x128x128xbf16>
    %8 = vector.shape_cast %7 : vector<1x128x128xbf16> to vector<128x128xbf16>
    %9 = arith.extf %8 : vector<128x128xbf16> to vector<128x128xf32>
    %10 = arith.addf %6, %9 : vector<128x128xf32>
    %11 = arith.truncf %10 : vector<128x128xf32> to vector<128x128xbf16>
    %c0_7 = arith.constant 0 : index
    %c0_8 = arith.constant 0 : index
    %c0_9 = arith.constant 0 : index
    %12 = vector.load %arg5[%c0_7, %c0_8, %c0_9] : memref<1x128x128xbf16, #tpu.memory_space<vmem>>, vector<1x128x128xbf16>
    %13 = vector.shape_cast %12 : vector<1x128x128xbf16> to vector<128x128xbf16>
    %cst_10 = arith.constant dense<0.000000e+00> : vector<128x128xf32>
    %14 = tpu.matmul %11, %13, %cst_10 {dimension_numbers = #tpu.dot_dimension_numbers<[1], [0], [0], [1], [0, 0, 1, 1], [], []>} : vector<128x128xbf16>, vector<128x128xbf16>, vector<128x128xf32> -> vector<128x128xf32>
    %c0_11 = arith.constant 0 : index
    %c0_12 = arith.constant 0 : index
    %c0_13 = arith.constant 0 : index
    %15 = vector.load %arg6[%c0_11, %c0_12, %c0_13] : memref<1x1x128xf32, #tpu.memory_space<vmem>>, vector<1x1x128xf32>
    %16 = vector.shape_cast %15 : vector<1x1x128xf32> to vector<1x128xf32>
    %17 = vector.broadcast %16 : vector<1x128xf32> to vector<128x128xf32>
    %18 = arith.addf %14, %17 : vector<128x128xf32>
    %cst_14 = arith.constant 0.000000e+00 : f32
    %19 = vector.broadcast %cst_14 : f32 to vector<128x128xf32>
    %20 = arith.maximumf %18, %19 : vector<128x128xf32>
    %21 = arith.truncf %20 : vector<128x128xf32> to vector<128x128xbf16>
    %c0_15 = arith.constant 0 : index
    %c0_16 = arith.constant 0 : index
    %c0_17 = arith.constant 0 : index
    %22 = vector.load %arg7[%c0_15, %c0_16, %c0_17] : memref<1x128x128xbf16, #tpu.memory_space<vmem>>, vector<1x128x128xbf16>
    %23 = vector.shape_cast %22 : vector<1x128x128xbf16> to vector<128x128xbf16>
    %cst_18 = arith.constant dense<0.000000e+00> : vector<128x128xf32>
    %24 = tpu.matmul %21, %23, %cst_18 {dimension_numbers = #tpu.dot_dimension_numbers<[1], [0], [0], [1], [0, 0, 1, 1], [], []>} : vector<128x128xbf16>, vector<128x128xbf16>, vector<128x128xf32> -> vector<128x128xf32>
    %c0_19 = arith.constant 0 : index
    %c0_20 = arith.constant 0 : index
    %c0_21 = arith.constant 0 : index
    %25 = vector.load %arg8[%c0_19, %c0_20, %c0_21] : memref<1x1x128xf32, #tpu.memory_space<vmem>>, vector<1x1x128xf32>
    %26 = vector.shape_cast %25 : vector<1x1x128xf32> to vector<1x128xf32>
    %27 = vector.broadcast %26 : vector<1x128xf32> to vector<128x128xf32>
    %28 = arith.addf %24, %27 : vector<128x128xf32>
    %c0_22 = arith.constant 0 : index
    %c0_23 = arith.constant 0 : index
    %29 = vector.load %arg1[%c0_22, %c0_23] : memref<128x1xf32, #tpu.memory_space<vmem>>, vector<128x1xf32>
    %30 = vector.broadcast %29 : vector<128x1xf32> to vector<128x128xf32>
    %31 = arith.mulf %28, %30 : vector<128x128xf32>
    %cst_24 = arith.constant dense<0.000000e+00> : vector<128xf32>
    %32 = vector.multi_reduction <add>, %31, %cst_24 [0] : vector<128x128xf32> to vector<128xf32>
    %33 = vector.shape_cast %32 : vector<128xf32> to vector<1x128xf32>
    %cst_25 = arith.constant 6.250000e-02 : f32
    %34 = vector.broadcast %cst_25 : f32 to vector<1x128xf32>
    %35 = arith.mulf %33, %34 : vector<1x128xf32>
    %36 = arith.mulf %31, %28 : vector<128x128xf32>
    %cst_26 = arith.constant dense<0.000000e+00> : vector<128xf32>
    %37 = vector.multi_reduction <add>, %36, %cst_26 [0] : vector<128x128xf32> to vector<128xf32>
    %38 = vector.shape_cast %37 : vector<128xf32> to vector<1x128xf32>
    %cst_27 = arith.constant 6.250000e-02 : f32
    %39 = vector.broadcast %cst_27 : f32 to vector<1x128xf32>
    %40 = arith.mulf %38, %39 : vector<1x128xf32>
    %41 = arith.mulf %35, %35 : vector<1x128xf32>
    %42 = arith.subf %40, %41 : vector<1x128xf32>
    %43 = vector.broadcast %35 : vector<1x128xf32> to vector<128x128xf32>
    %44 = arith.subf %28, %43 : vector<128x128xf32>
    %cst_28 = arith.constant 9.99999974E-6 : f32
    %45 = vector.broadcast %cst_28 : f32 to vector<1x128xf32>
    %46 = arith.addf %42, %45 : vector<1x128xf32>
    %47 = math.rsqrt %46 : vector<1x128xf32>
    %48 = vector.broadcast %47 : vector<1x128xf32> to vector<128x128xf32>
    %49 = arith.mulf %44, %48 : vector<128x128xf32>
    %c0_29 = arith.constant 0 : index
    %c0_30 = arith.constant 0 : index
    %c0_31 = arith.constant 0 : index
    %50 = vector.load %arg9[%c0_29, %c0_30, %c0_31] : memref<1x1x128xf32, #tpu.memory_space<vmem>>, vector<1x1x128xf32>
    %51 = vector.shape_cast %50 : vector<1x1x128xf32> to vector<1x128xf32>
    %52 = vector.broadcast %51 : vector<1x128xf32> to vector<128x128xf32>
    %53 = arith.mulf %49, %52 : vector<128x128xf32>
    %c0_32 = arith.constant 0 : index
    %c0_33 = arith.constant 0 : index
    %c0_34 = arith.constant 0 : index
    %54 = vector.load %arg10[%c0_32, %c0_33, %c0_34] : memref<1x1x128xf32, #tpu.memory_space<vmem>>, vector<1x1x128xf32>
    %55 = vector.shape_cast %54 : vector<1x1x128xf32> to vector<1x128xf32>
    %56 = vector.broadcast %55 : vector<1x128xf32> to vector<128x128xf32>
    %57 = arith.addf %53, %56 : vector<128x128xf32>
    %c1_i32 = arith.constant 1 : i32
    %58 = arith.cmpi slt, %arg0, %c1_i32 : i32
    %59 = arith.extui %58 : i1 to i32
    %c0_i32_35 = arith.constant 0 : i32
    %60 = arith.cmpi ne, %59, %c0_i32_35 : i32
    scf.if %60 {
      %cst_38 = arith.constant 0.000000e+00 : f32
      %64 = vector.broadcast %cst_38 : f32 to vector<128x128xf32>
      %65 = arith.maximumf %57, %64 : vector<128x128xf32>
      %c0_39 = arith.constant 0 : index
      %c0_40 = arith.constant 0 : index
      %66 = vector.load %arg11[%c0_39, %c0_40] : memref<128x128xf32, #tpu.memory_space<vmem>>, vector<128x128xf32>
      tpu.vector_store %arg11[%c0_39, %c0_40], %65 {strides = array<i32>} : memref<128x128xf32, #tpu.memory_space<vmem>>, vector<128x128xf32>,
    } else {
    }
    %c1_i32_36 = arith.constant 1 : i32
    %61 = arith.cmpi eq, %arg0, %c1_i32_36 : i32
    %62 = arith.extui %61 : i1 to i32
    %c0_i32_37 = arith.constant 0 : i32
    %63 = arith.cmpi ne, %62, %c0_i32_37 : i32
    scf.if %63 {
      %c0_38 = arith.constant 0 : index
      %c0_39 = arith.constant 0 : index
      %64 = vector.load %arg11[%c0_38, %c0_39] : memref<128x128xf32, #tpu.memory_space<vmem>>, vector<128x128xf32>
      tpu.vector_store %arg11[%c0_38, %c0_39], %57 {strides = array<i32>} : memref<128x128xf32, #tpu.memory_space<vmem>>, vector<128x128xf32>,
    } else {
    }
    return
  }
  func.func @transform_0(%arg0: i32) -> (i32, i32) {
    %c0_i32 = arith.constant 0 : i32
    %c0_i32_0 = arith.constant 0 : i32
    %c0_i32_1 = arith.constant 0 : i32
    return %c0_i32, %c0_i32_0 : i32, i32
  }
  func.func @transform_1(%arg0: i32) -> (i32, i32) {
    %c0_i32 = arith.constant 0 : i32
    %c0_i32_0 = arith.constant 0 : i32
    %c0_i32_1 = arith.constant 0 : i32
    return %c0_i32, %c0_i32_0 : i32, i32
  }
  func.func @transform_2(%arg0: i32) -> (i32, i32) {
    %c0_i32 = arith.constant 0 : i32
    %c0_i32_0 = arith.constant 0 : i32
    %c0_i32_1 = arith.constant 0 : i32
    return %c0_i32, %c0_i32_0 : i32, i32
  }
  func.func @transform_3(%arg0: i32) -> (i32, i32, i32) {
    %c0_i32 = arith.constant 0 : i32
    %c0_i32_0 = arith.constant 0 : i32
    %c0_i32_1 = arith.constant 0 : i32
    return %arg0, %c0_i32, %c0_i32_0 : i32, i32, i32
  }
  func.func @transform_4(%arg0: i32) -> (i32, i32, i32) {
    %c0_i32 = arith.constant 0 : i32
    %c0_i32_0 = arith.constant 0 : i32
    %c0_i32_1 = arith.constant 0 : i32
    return %arg0, %c0_i32, %c0_i32_0 : i32, i32, i32
  }
  func.func @transform_5(%arg0: i32) -> (i32, i32, i32) {
    %c0_i32 = arith.constant 0 : i32
    %c0_i32_0 = arith.constant 0 : i32
    %c0_i32_1 = arith.constant 0 : i32
    return %arg0, %c0_i32, %c0_i32_0 : i32, i32, i32
  }
  func.func @transform_6(%arg0: i32) -> (i32, i32, i32) {
    %c0_i32 = arith.constant 0 : i32
    %c0_i32_0 = arith.constant 0 : i32
    %c0_i32_1 = arith.constant 0 : i32
    return %arg0, %c0_i32, %c0_i32_0 : i32, i32, i32
  }
  func.func @transform_7(%arg0: i32) -> (i32, i32, i32) {
    %c0_i32 = arith.constant 0 : i32
    %c0_i32_0 = arith.constant 0 : i32
    %c0_i32_1 = arith.constant 0 : i32
    return %arg0, %c0_i32, %c0_i32_0 : i32, i32, i32
  }
  func.func @transform_8(%arg0: i32) -> (i32, i32, i32) {
    %c0_i32 = arith.constant 0 : i32
    %c0_i32_0 = arith.constant 0 : i32
    %c0_i32_1 = arith.constant 0 : i32
    return %arg0, %c0_i32, %c0_i32_0 : i32, i32, i32
  }
  func.func @transform_9(%arg0: i32) -> (i32, i32, i32) {
    %c0_i32 = arith.constant 0 : i32
    %c0_i32_0 = arith.constant 0 : i32
    %c0_i32_1 = arith.constant 0 : i32
    return %arg0, %c0_i32, %c0_i32_0 : i32, i32, i32
  }
  func.func @transform_10(%arg0: i32) -> (i32, i32) {
    %c0_i32 = arith.constant 0 : i32
    %c0_i32_0 = arith.constant 0 : i32
    %c0_i32_1 = arith.constant 0 : i32
    return %c0_i32, %c0_i32_0 : i32, i32
  }
}

</mosaic_0001>

<llo_original>
// kernel: tpu_custom_call.1
$region0: #{tpu_custom_call.1}
  #allocation0 [shape = 'u32[]', space=smem, size = 0x4, offset = 0x4, fixed_abs, tag = 'smem constant byte address 0x4 - core index']
  #allocation1 [shape = 'u32[72,128]{1,0:T(1,128)}', space=vmem, size = 0x9000, scoped, tag = 'internal scratch']
  %s0 = inlined_call_operand.vmem [shape: f32[128,1], index: 0, kind: input, shape index: {}]
  %s1 = inlined_call_operand.vmem [shape: f32[128,128], index: 1, kind: input, shape index: {}]
  %s2 = inlined_call_operand.hbm [shape: bf16[128,128], index: 2, kind: input, shape index: {}]
  %s3 = inlined_call_operand.hbm [shape: bf16[2,128,128], index: 3, kind: input, shape index: {}]
  %s4 = inlined_call_operand.hbm [shape: bf16[2,128,128], index: 4, kind: input, shape index: {}]
  %s5 = inlined_call_operand.vmem [shape: f32[2,1,128], index: 5, kind: input, shape index: {}]
  %s6 = inlined_call_operand.hbm [shape: bf16[2,128,128], index: 6, kind: input, shape index: {}]
  %s7 = inlined_call_operand.vmem [shape: f32[2,1,128], index: 7, kind: input, shape index: {}]
  %s8 = inlined_call_operand.vmem [shape: f32[2,1,128], index: 8, kind: input, shape index: {}]
  %s9 = inlined_call_operand.vmem [shape: f32[2,1,128], index: 9, kind: input, shape index: {}]
  %s10 = inlined_call_operand.hbm [shape: f32[128,128], index: 10, kind: output, shape index: {}]
  %s11 = sld [smem:[#allocation0]]
  $region101: #{tpu_custom_call.1} parent=0
    _
  %s13 = ssub.s32 1, %s11
  %s14 = scalar_select 0, %s13, %s11
  $region1: #{tpu_custom_call.1} parent=0
    #allocation2 [shape = 'u8[32768]{0}', space=vmem, size = 0x8000, scoped, tag = 'input window, operand 2, single buffered']
    #allocation3 [shape = 's32[2]{0}', space=sflag, size = 0x8, scoped, tag = 'scoped memory for tpu_custom_call.1']
    #allocation4 [shape = 's32[2]{0}', space=sflag, size = 0x8, scoped, tag = 'scoped memory for tpu_custom_call.1']
    #allocation5 [shape = 'u8[65536]{0}', space=vmem, size = 0x10000, scoped, tag = 'input window, operand 3']
    #allocation6 [shape = 's32[2]{0}', space=sflag, size = 0x8, scoped, tag = 'scoped memory for tpu_custom_call.1']
    #allocation7 [shape = 'u8[65536]{0}', space=vmem, size = 0x10000, scoped, tag = 'input window, operand 4']
    #allocation8 [shape = 'u8[65536]{0}', space=vmem, size = 0x10000, scoped, tag = 'input window, operand 6']
    #allocation9 [shape = 's32[2]{0}', space=sflag, size = 0x8, scoped, tag = 'scoped memory for tpu_custom_call.1']
    #allocation10 [shape = 'u8[65536]{0}', space=vmem, size = 0x10000, scoped, tag = 'output window, operand 0, single buffered']
    %15 = vsyncpa [#allocation3], 0
    %16 = vsyncpa [#allocation6], 0
    %s17 = scalar_lea.sflag [#allocation6], 1
    %18 = vsyncpa %s17, 0
    %19 = vsyncpa [#allocation9], 0
    %s20 = scalar_lea.sflag [#allocation9], 1
    %21 = vsyncpa %s20, 0
    %22 = vsyncpa [#allocation4], 0
    loop: start=0, step=1, limit=4
    $region2: #{tpu_custom_call.1} parent=1 // loop_pre_header
      _
    $region3: #{tpu_custom_call.1} parent=1 // loop_header
      %s24 = sphi 0, %s28
      %p25 = scmp.ge.s32.totalorder %s24, 4
      %s32 = sphi 0, %s32
      %s34 = sphi 0, %s32
      %s35 = sphi 0, %s34
      %s49 = sphi 0, %s35
      %s53 = sphi 0, %s53
      %s55 = sphi 0, %s53
      %s56 = sphi 0, %s55
      %s70 = sphi 0, %s56
      %s74 = sphi 0, %s74
      %s76 = sphi 0, %s74
      %s77 = sphi 0, %s76
      %s91 = sphi 0, %s77
      %s97 = sphi 0, %s99
      %s100 = sphi 0, %s97
      %s101 = sphi 0, %s100
      %s117 = sphi 0, %s101
      %s123 = sphi 0, %s125
      %s126 = sphi 0, %s123
      %s127 = sphi 0, %s126
      %s143 = sphi 0, %s127
      %s149 = sphi 0, %s151
      %s152 = sphi 0, %s149
      %s153 = sphi 0, %s152
      %s169 = sphi 0, %s153
      %s175 = sphi 0, %s177
      %s178 = sphi 0, %s175
      %s179 = sphi 0, %s178
      %s195 = sphi 0, %s179
      %s201 = sphi 0, %s203
      %s204 = sphi 0, %s201
      %s205 = sphi 0, %s204
      %s221 = sphi 0, %s205
      %s227 = sphi 0, %s229
      %s230 = sphi 0, %s227
      %s231 = sphi 0, %s230
      %s247 = sphi 0, %s231
      %s253 = sphi 0, %s255
      %s256 = sphi 0, %s253
      %s257 = sphi 0, %s256
      %s273 = sphi 0, %s257
      %s277 = sphi 0, %s277
      %s279 = sphi 0, %s277
      %s280 = sphi 0, %s279
      %s294 = sphi 0, %s280
    $region4: #{tpu_custom_call.1} parent=1 // loop_header_branch
      %27 = sbr.rel (%p25) target = $region8
    $region5: #{tpu_custom_call.1} parent=1 // loop_body
      %s29 = ssub.s32 %s24, 1
      %s30 = ssub.s32 %s24, 2
      %s31 = sadd.s32 %s24, 1
      %s33 = sadd.s32 %s32, 1
      %p36 = scmp.eq.s32.totalorder %s24, 1
      %p37 = scmp.ne.s32.totalorder %s32, %s34
      %p38 = scmp.eq.s32.totalorder %s24, 0
      %p39 = por %p37, %p38
      %p40 = scmp.ne.s32.totalorder %s32, %s34
      %p41 = scmp.eq.s32.totalorder %s29, 1
      %p42 = por %p40, %p41
      %p43 = scmp.ne.s32.totalorder %s34, %s35
      %p44 = scmp.eq.s32.totalorder %s29, 0
      %p45 = por %p43, %p44
      %p46 = scmp.ne.s32.totalorder %s34, %s35
      %p47 = scmp.eq.s32.totalorder %s30, 1
      %p48 = por %p46, %p47
      %p50 = scmp.ne.s32.totalorder %s35, %s49
      %p51 = scmp.eq.s32.totalorder %s30, 0
      %p52 = por %p50, %p51
      %s54 = sadd.s32 %s53, 1
      %p57 = scmp.eq.s32.totalorder %s24, 1
      %p58 = scmp.ne.s32.totalorder %s53, %s55
      %p59 = scmp.eq.s32.totalorder %s24, 0
      %p60 = por %p58, %p59
      %p61 = scmp.ne.s32.totalorder %s53, %s55
      %p62 = scmp.eq.s32.totalorder %s29, 1
      %p63 = por %p61, %p62
      %p64 = scmp.ne.s32.totalorder %s55, %s56
      %p65 = scmp.eq.s32.totalorder %s29, 0
      %p66 = por %p64, %p65
      %p67 = scmp.ne.s32.totalorder %s55, %s56
      %p68 = scmp.eq.s32.totalorder %s30, 1
      %p69 = por %p67, %p68
      %p71 = scmp.ne.s32.totalorder %s56, %s70
      %p72 = scmp.eq.s32.totalorder %s30, 0
      %p73 = por %p71, %p72
      %s75 = sadd.s32 %s74, 1
      %p78 = scmp.eq.s32.totalorder %s24, 1
      %p79 = scmp.ne.s32.totalorder %s74, %s76
      %p80 = scmp.eq.s32.totalorder %s24, 0
      %p81 = por %p79, %p80
      %p82 = scmp.ne.s32.totalorder %s74, %s76
      %p83 = scmp.eq.s32.totalorder %s29, 1
      %p84 = por %p82, %p83
      %p85 = scmp.ne.s32.totalorder %s76, %s77
      %p86 = scmp.eq.s32.totalorder %s29, 0
      %p87 = por %p85, %p86
      %p88 = scmp.ne.s32.totalorder %s76, %s77
      %p89 = scmp.eq.s32.totalorder %s30, 1
      %p90 = por %p88, %p89
      %p92 = scmp.ne.s32.totalorder %s77, %s91
      %p93 = scmp.eq.s32.totalorder %s30, 0
      %p94 = por %p92, %p93
      %s95 = ssub.s32 %s24, %s31
      %p96 = scmp.eq.s32.totalorder %s95, 0
      %s98 = sadd.s32 %s97, 1
      %s99 = scalar_select %p96, %s97, %s98
      %p102 = pneg %p96
      %p103 = scmp.eq.s32.totalorder %s24, 1
      %p104 = por %p102, %p103
      %p105 = scmp.ne.s32.totalorder %s97, %s100
      %p106 = scmp.eq.s32.totalorder %s24, 0
      %p107 = por %p105, %p106
      %p108 = scmp.ne.s32.totalorder %s97, %s100
      %p109 = scmp.eq.s32.totalorder %s29, 1
      %p110 = por %p108, %p109
      %p111 = scmp.ne.s32.totalorder %s100, %s101
      %p112 = scmp.eq.s32.totalorder %s29, 0
      %p113 = por %p111, %p112
      %p114 = scmp.ne.s32.totalorder %s100, %s101
      %p115 = scmp.eq.s32.totalorder %s30, 1
      %p116 = por %p114, %p115
      %p118 = scmp.ne.s32.totalorder %s101, %s117
      %p119 = scmp.eq.s32.totalorder %s30, 0
      %p120 = por %p118, %p119
      %s121 = ssub.s32 %s24, %s31
      %p122 = scmp.eq.s32.totalorder %s121, 0
      %s124 = sadd.s32 %s123, 1
      %s125 = scalar_select %p122, %s123, %s124
      %p128 = pneg %p122
      %p129 = scmp.eq.s32.totalorder %s24, 1
      %p130 = por %p128, %p129
      %p131 = scmp.ne.s32.totalorder %s123, %s126
      %p132 = scmp.eq.s32.totalorder %s24, 0
      %p133 = por %p131, %p132
      %p134 = scmp.ne.s32.totalorder %s123, %s126
      %p135 = scmp.eq.s32.totalorder %s29, 1
      %p136 = por %p134, %p135
      %p137 = scmp.ne.s32.totalorder %s126, %s127
      %p138 = scmp.eq.s32.totalorder %s29, 0
      %p139 = por %p137, %p138
      %p140 = scmp.ne.s32.totalorder %s126, %s127
      %p141 = scmp.eq.s32.totalorder %s30, 1
      %p142 = por %p140, %p141
      %p144 = scmp.ne.s32.totalorder %s127, %s143
      %p145 = scmp.eq.s32.totalorder %s30, 0
      %p146 = por %p144, %p145
      %s147 = ssub.s32 %s24, %s31
      %p148 = scmp.eq.s32.totalorder %s147, 0
      %s150 = sadd.s32 %s149, 1
      %s151 = scalar_select %p148, %s149, %s150
      %p154 = pneg %p148
      %p155 = scmp.eq.s32.totalorder %s24, 1
      %p156 = por %p154, %p155
      %p157 = scmp.ne.s32.totalorder %s149, %s152
      %p158 = scmp.eq.s32.totalorder %s24, 0
      %p159 = por %p157, %p158
      %p160 = scmp.ne.s32.totalorder %s149, %s152
      %p161 = scmp.eq.s32.totalorder %s29, 1
      %p162 = por %p160, %p161
      %p163 = scmp.ne.s32.totalorder %s152, %s153
      %p164 = scmp.eq.s32.totalorder %s29, 0
      %p165 = por %p163, %p164
      %p166 = scmp.ne.s32.totalorder %s152, %s153
      %p167 = scmp.eq.s32.totalorder %s30, 1
      %p168 = por %p166, %p167
      %p170 = scmp.ne.s32.totalorder %s153, %s169
      %p171 = scmp.eq.s32.totalorder %s30, 0
      %p172 = por %p170, %p171
      %s173 = ssub.s32 %s24, %s31
      %p174 = scmp.eq.s32.totalorder %s173, 0
      %s176 = sadd.s32 %s175, 1
      %s177 = scalar_select %p174, %s175, %s176
      %p180 = pneg %p174
      %p181 = scmp.eq.s32.totalorder %s24, 1
      %p182 = por %p180, %p181
      %p183 = scmp.ne.s32.totalorder %s175, %s178
      %p184 = scmp.eq.s32.totalorder %s24, 0
      %p185 = por %p183, %p184
      %p186 = scmp.ne.s32.totalorder %s175, %s178
      %p187 = scmp.eq.s32.totalorder %s29, 1
      %p188 = por %p186, %p187
      %p189 = scmp.ne.s32.totalorder %s178, %s179
      %p190 = scmp.eq.s32.totalorder %s29, 0
      %p191 = por %p189, %p190
      %p192 = scmp.ne.s32.totalorder %s178, %s179
      %p193 = scmp.eq.s32.totalorder %s30, 1
      %p194 = por %p192, %p193
      %p196 = scmp.ne.s32.totalorder %s179, %s195
      %p197 = scmp.eq.s32.totalorder %s30, 0
      %p198 = por %p196, %p197
      %s199 = ssub.s32 %s24, %s31
      %p200 = scmp.eq.s32.totalorder %s199, 0
      %s202 = sadd.s32 %s201, 1
      %s203 = scalar_select %p200, %s201, %s202
      %p206 = pneg %p200
      %p207 = scmp.eq.s32.totalorder %s24, 1
      %p208 = por %p206, %p207
      %p209 = scmp.ne.s32.totalorder %s201, %s204
      %p210 = scmp.eq.s32.totalorder %s24, 0
      %p211 = por %p209, %p210
      %p212 = scmp.ne.s32.totalorder %s201, %s204
      %p213 = scmp.eq.s32.totalorder %s29, 1
      %p214 = por %p212, %p213
      %p215 = scmp.ne.s32.totalorder %s204, %s205
      %p216 = scmp.eq.s32.totalorder %s29, 0
      %p217 = por %p215, %p216
      %p218 = scmp.ne.s32.totalorder %s204, %s205
      %p219 = scmp.eq.s32.totalorder %s30, 1
      %p220 = por %p218, %p219
      %p222 = scmp.ne.s32.totalorder %s205, %s221
      %p223 = scmp.eq.s32.totalorder %s30, 0
      %p224 = por %p222, %p223
      %s225 = ssub.s32 %s24, %s31
      %p226 = scmp.eq.s32.totalorder %s225, 0
      %s228 = sadd.s32 %s227, 1
      %s229 = scalar_select %p226, %s227, %s228
      %p232 = pneg %p226
      %p233 = scmp.eq.s32.totalorder %s24, 1
      %p234 = por %p232, %p233
      %p235 = scmp.ne.s32.totalorder %s227, %s230
      %p236 = scmp.eq.s32.totalorder %s24, 0
      %p237 = por %p235, %p236
      %p238 = scmp.ne.s32.totalorder %s227, %s230
      %p239 = scmp.eq.s32.totalorder %s29, 1
      %p240 = por %p238, %p239
      %p241 = scmp.ne.s32.totalorder %s230, %s231
      %p242 = scmp.eq.s32.totalorder %s29, 0
      %p243 = por %p241, %p242
      %p244 = scmp.ne.s32.totalorder %s230, %s231
      %p245 = scmp.eq.s32.totalorder %s30, 1
      %p246 = por %p244, %p245
      %p248 = scmp.ne.s32.totalorder %s231, %s247
      %p249 = scmp.eq.s32.totalorder %s30, 0
      %p250 = por %p248, %p249
      %s251 = ssub.s32 %s24, %s31
      %p252 = scmp.eq.s32.totalorder %s251, 0
      %s254 = sadd.s32 %s253, 1
      %s255 = scalar_select %p252, %s253, %s254
      %p258 = pneg %p252
      %p259 = scmp.eq.s32.totalorder %s24, 1
      %p260 = por %p258, %p259
      %p261 = scmp.ne.s32.totalorder %s253, %s256
      %p262 = scmp.eq.s32.totalorder %s24, 0
      %p263 = por %p261, %p262
      %p264 = scmp.ne.s32.totalorder %s253, %s256
      %p265 = scmp.eq.s32.totalorder %s29, 1
      %p266 = por %p264, %p265
      %p267 = scmp.ne.s32.totalorder %s256, %s257
      %p268 = scmp.eq.s32.totalorder %s29, 0
      %p269 = por %p267, %p268
      %p270 = scmp.ne.s32.totalorder %s256, %s257
      %p271 = scmp.eq.s32.totalorder %s30, 1
      %p272 = por %p270, %p271
      %p274 = scmp.ne.s32.totalorder %s257, %s273
      %p275 = scmp.eq.s32.totalorder %s30, 0
      %p276 = por %p274, %p275
      %s278 = sadd.s32 %s277, 1
      %p281 = scmp.eq.s32.totalorder %s24, 1
      %p282 = scmp.ne.s32.totalorder %s277, %s279
      %p283 = scmp.eq.s32.totalorder %s24, 0
      %p284 = por %p282, %p283
      %p285 = scmp.ne.s32.totalorder %s277, %s279
      %p286 = scmp.eq.s32.totalorder %s29, 1
      %p287 = por %p285, %p286
      %p288 = scmp.ne.s32.totalorder %s279, %s280
      %p289 = scmp.eq.s32.totalorder %s29, 0
      %p290 = por %p288, %p289
      %p291 = scmp.ne.s32.totalorder %s279, %s280
      %p292 = scmp.eq.s32.totalorder %s30, 1
      %p293 = por %p291, %p292
      %p295 = scmp.ne.s32.totalorder %s280, %s294
      %p296 = scmp.eq.s32.totalorder %s30, 0
      %p297 = por %p295, %p296
      %p298 = scmp.le.s32.totalorder 1, %s24
      %p299 = scmp.lt.s32.totalorder %s24, 3
      %p300 = pnand %p298, %p299
      %p301 = pneg %p300
      // Predicated region
      $region9: #{tpu_custom_call.1} parent=5 // pred_check
        _
      $region10: #{tpu_custom_call.1} parent=5 // pred_check_branch
        %303 = sbr.rel (%p300) target = $region12
      $region11: #{tpu_custom_call.1} parent=5 // pred_region
        %s304 = ssub.s32 %s24, 1
        // Predicated region
        $region13: #{tpu_custom_call.1} parent=11 // pred_check
          %p305 = pneg %p45
        $region14: #{tpu_custom_call.1} parent=11 // pred_check_branch
          %307 = sbr.rel (%p305) target = $region16
        $region15: #{tpu_custom_call.1} parent=11 // pred_region
          _
        $region16: #{tpu_custom_call.1} parent=11 // pred_fallthru
          _
        // Predicated region
        $region17: #{tpu_custom_call.1} parent=11 // pred_check
          %p308 = pneg %p66
        $region18: #{tpu_custom_call.1} parent=11 // pred_check_branch
          %310 = sbr.rel (%p308) target = $region20
        $region19: #{tpu_custom_call.1} parent=11 // pred_region
          _
        $region20: #{tpu_custom_call.1} parent=11 // pred_fallthru
          _
        // Predicated region
        $region21: #{tpu_custom_call.1} parent=11 // pred_check
          %p311 = pneg %p87
        $region22: #{tpu_custom_call.1} parent=11 // pred_check_branch
          %313 = sbr.rel (%p311) target = $region24
        $region23: #{tpu_custom_call.1} parent=11 // pred_region
          %315 = vsyncadd [#allocation3], 0
          %s316 = sshll.u32 %s2, 4
          %s317 = int_to_ptr.hbm [resolvable:$true] %s316
          %s318 = sshll.u32 [#allocation2], 4
          %s319 = int_to_ptr.vmem [resolvable:$true] %s318
          %324 = dma.hbm_to_vmem [thread:$0]  %s317, 1024, %s319, [#allocation3], 64, 64, 4
        $region24: #{tpu_custom_call.1} parent=11 // pred_fallthru
          _
      $region12: #{tpu_custom_call.1} parent=5 // pred_fallthru
        _
      %p325 = scmp.lt.s32.totalorder %s24, 2
      // Predicated region
      $region25: #{tpu_custom_call.1} parent=5 // pred_check
        %p326 = pneg %p325
      $region26: #{tpu_custom_call.1} parent=5 // pred_check_branch
        %328 = sbr.rel (%p326) target = $region28
      $region27: #{tpu_custom_call.1} parent=5 // pred_region
        // Predicated region
        $region29: #{tpu_custom_call.1} parent=27 // pred_check
          %p329 = pneg %p107
        $region30: #{tpu_custom_call.1} parent=27 // pred_check_branch
          %331 = sbr.rel (%p329) target = $region32
        $region31: #{tpu_custom_call.1} parent=27 // pred_region
          %s332 = sand.u32 %s24, 1
          %s333 = scalar_lea.sflag [#allocation6], %s332
          %s334 = sand.u32 %s97, 1
          %s335 = smul.addr %s334, 64
          %s336 = scalar_lea.vmem [#allocation5], %s335
          %338 = vsyncadd %s333, 0
          %s339 = smul.addr %s24, 16
          %s340 = smul.addr %s339, 4
          %s341 = scalar_lea.hbm %s3, %s340
          %s342 = sshll.u32 %s341, 4
          %s343 = int_to_ptr.hbm [resolvable:$true] %s342
          %s344 = sshll.u32 %s336, 4
          %s345 = int_to_ptr.vmem [resolvable:$true] %s344
          %350 = dma.hbm_to_vmem [thread:$0]  %s343, 1024, %s345, %s333, 64, 64, 4
        $region32: #{tpu_custom_call.1} parent=27 // pred_fallthru
          _
        // Predicated region
        $region33: #{tpu_custom_call.1} parent=27 // pred_check
          %p351 = pneg %p133
        $region34: #{tpu_custom_call.1} parent=27 // pred_check_branch
          %353 = sbr.rel (%p351) target = $region36
        $region35: #{tpu_custom_call.1} parent=27 // pred_region
          %s354 = sand.u32 %s24, 1
          %s355 = scalar_lea.sflag [#allocation6], %s354
          %s356 = sand.u32 %s123, 1
          %s357 = smul.addr %s356, 64
          %s358 = scalar_lea.vmem [#allocation7], %s357
          %360 = vsyncadd %s355, 0
          %s361 = smul.addr %s24, 16
          %s362 = smul.addr %s361, 4
          %s363 = scalar_lea.hbm %s4, %s362
          %s364 = sshll.u32 %s363, 4
          %s365 = int_to_ptr.hbm [resolvable:$true] %s364
          %s366 = sshll.u32 %s358, 4
          %s367 = int_to_ptr.vmem [resolvable:$true] %s366
          %372 = dma.hbm_to_vmem [thread:$0]  %s365, 1024, %s367, %s355, 64, 64, 4
        $region36: #{tpu_custom_call.1} parent=27 // pred_fallthru
          _
        // Predicated region
        $region37: #{tpu_custom_call.1} parent=27 // pred_check
          %p373 = pneg %p159
        $region38: #{tpu_custom_call.1} parent=27 // pred_check_branch
          %375 = sbr.rel (%p373) target = $region40
        $region39: #{tpu_custom_call.1} parent=27 // pred_region
          %p376 = scmp.lt.s32.totalorder %s24, 1
          %s377 = scalar_select %p376, %s24, 1
          %s378 = scalar_lea.vmem %s5, %s377
        $region40: #{tpu_custom_call.1} parent=27 // pred_fallthru
          _
        // Predicated region
        $region41: #{tpu_custom_call.1} parent=27 // pred_check
          %p379 = pneg %p185
        $region42: #{tpu_custom_call.1} parent=27 // pred_check_branch
          %381 = sbr.rel (%p379) target = $region44
        $region43: #{tpu_custom_call.1} parent=27 // pred_region
          %s382 = sand.u32 %s175, 1
          %s383 = scalar_lea.sflag [#allocation9], %s382
          %s384 = sand.u32 %s175, 1
          %s385 = smul.addr %s384, 64
          %s386 = scalar_lea.vmem [#allocation8], %s385
          %388 = vsyncadd %s383, 0
          %s389 = smul.addr %s24, 16
          %s390 = smul.addr %s389, 4
          %s391 = scalar_lea.hbm %s6, %s390
          %s392 = sshll.u32 %s391, 4
          %s393 = int_to_ptr.hbm [resolvable:$true] %s392
          %s394 = sshll.u32 %s386, 4
          %s395 = int_to_ptr.vmem [resolvable:$true] %s394
          %400 = dma.hbm_to_vmem [thread:$0]  %s393, 1024, %s395, %s383, 64, 64, 4
        $region44: #{tpu_custom_call.1} parent=27 // pred_fallthru
          _
        // Predicated region
        $region45: #{tpu_custom_call.1} parent=27 // pred_check
          %p401 = pneg %p211
        $region46: #{tpu_custom_call.1} parent=27 // pred_check_branch
          %403 = sbr.rel (%p401) target = $region48
        $region47: #{tpu_custom_call.1} parent=27 // pred_region
          %p404 = scmp.lt.s32.totalorder %s24, 1
          %s405 = scalar_select %p404, %s24, 1
          %s406 = scalar_lea.vmem %s7, %s405
        $region48: #{tpu_custom_call.1} parent=27 // pred_fallthru
          _
        // Predicated region
        $region49: #{tpu_custom_call.1} parent=27 // pred_check
          %p407 = pneg %p237
        $region50: #{tpu_custom_call.1} parent=27 // pred_check_branch
          %409 = sbr.rel (%p407) target = $region52
        $region51: #{tpu_custom_call.1} parent=27 // pred_region
          %p410 = scmp.lt.s32.totalorder %s24, 1
          %s411 = scalar_select %p410, %s24, 1
          %s412 = scalar_lea.vmem %s8, %s411
        $region52: #{tpu_custom_call.1} parent=27 // pred_fallthru
          _
        // Predicated region
        $region53: #{tpu_custom_call.1} parent=27 // pred_check
          %p413 = pneg %p263
        $region54: #{tpu_custom_call.1} parent=27 // pred_check_branch
          %415 = sbr.rel (%p413) target = $region56
        $region55: #{tpu_custom_call.1} parent=27 // pred_region
          %p416 = scmp.lt.s32.totalorder %s24, 1
          %s417 = scalar_select %p416, %s24, 1
          %s418 = scalar_lea.vmem %s9, %s417
        $region56: #{tpu_custom_call.1} parent=27 // pred_fallthru
          _
      $region28: #{tpu_custom_call.1} parent=5 // pred_fallthru
        _
      %p419 = scmp.le.s32.totalorder 1, %s24
      %p420 = scmp.lt.s32.totalorder %s24, 3
      %p421 = pnand %p419, %p420
      %p422 = pneg %p421
      // Predicated region
      $region57: #{tpu_custom_call.1} parent=5 // pred_check
        _
      $region58: #{tpu_custom_call.1} parent=5 // pred_check_branch
        %424 = sbr.rel (%p421) target = $region60
      $region59: #{tpu_custom_call.1} parent=5 // pred_region
        %s425 = ssub.s32 %s24, 1
        // Predicated region
        $region61: #{tpu_custom_call.1} parent=59 // pred_check
          %p426 = pneg %p87
        $region62: #{tpu_custom_call.1} parent=59 // pred_check_branch
          %428 = sbr.rel (%p426) target = $region64
        $region63: #{tpu_custom_call.1} parent=59 // pred_region
          %430 = dma.done [#allocation3], 1024
        $region64: #{tpu_custom_call.1} parent=59 // pred_fallthru
          _
        %s431 = sand.u32 %s29, 1
        %s432 = scalar_lea.sflag [#allocation6], %s431
        %s433 = sand.u32 %s100, 1
        %s434 = smul.addr %s433, 64
        %s435 = scalar_lea.vmem [#allocation5], %s434
        // Predicated region
        $region65: #{tpu_custom_call.1} parent=59 // pred_check
          %p436 = pneg %p113
        $region66: #{tpu_custom_call.1} parent=59 // pred_check_branch
          %438 = sbr.rel (%p436) target = $region68
        $region67: #{tpu_custom_call.1} parent=59 // pred_region
          %440 = dma.done %s432, 1024
        $region68: #{tpu_custom_call.1} parent=59 // pred_fallthru
          _
        %s441 = sand.u32 %s29, 1
        %s442 = scalar_lea.sflag [#allocation6], %s441
        %s443 = sand.u32 %s126, 1
        %s444 = smul.addr %s443, 64
        %s445 = scalar_lea.vmem [#allocation7], %s444
        // Predicated region
        $region69: #{tpu_custom_call.1} parent=59 // pred_check
          %p446 = pneg %p139
        $region70: #{tpu_custom_call.1} parent=59 // pred_check_branch
          %448 = sbr.rel (%p446) target = $region72
        $region71: #{tpu_custom_call.1} parent=59 // pred_region
          %450 = dma.done %s442, 1024
        $region72: #{tpu_custom_call.1} parent=59 // pred_fallthru
          _
        %s451 = sand.u32 %s178, 1
        %s452 = scalar_lea.sflag [#allocation9], %s451
        %s453 = sand.u32 %s178, 1
        %s454 = smul.addr %s453, 64
        %s455 = scalar_lea.vmem [#allocation8], %s454
        // Predicated region
        $region73: #{tpu_custom_call.1} parent=59 // pred_check
          %p456 = pneg %p191
        $region74: #{tpu_custom_call.1} parent=59 // pred_check_branch
          %458 = sbr.rel (%p456) target = $region76
        $region75: #{tpu_custom_call.1} parent=59 // pred_region
          %460 = dma.done %s452, 1024
        $region76: #{tpu_custom_call.1} parent=59 // pred_fallthru
          _
        %p461 = pneg %p45
        %p462 = pneg %p42
        %p463 = pneg %p66
        %p464 = pneg %p63
        %p465 = pneg %p87
        %p466 = pneg %p84
        %s467 = sand.u32 %s29, 1
        %s468 = scalar_lea.sflag [#allocation6], %s467
        %s469 = sand.u32 %s100, 1
        %s470 = smul.addr %s469, 64
        %s471 = scalar_lea.vmem [#allocation5], %s470
        %p472 = pneg %p113
        %p473 = pneg %p110
        %s474 = sand.u32 %s29, 1
        %s475 = scalar_lea.sflag [#allocation6], %s474
        %s476 = sand.u32 %s126, 1
        %s477 = smul.addr %s476, 64
        %s478 = scalar_lea.vmem [#allocation7], %s477
        %p479 = pneg %p139
        %p480 = pneg %p136
        %p481 = scmp.lt.s32.totalorder %s29, 1
        %s482 = scalar_select %p481, %s29, 1
        %s483 = scalar_lea.vmem %s5, %s482
        %p484 = pneg %p165
        %p485 = pneg %p162
        %s486 = sand.u32 %s178, 1
        %s487 = scalar_lea.sflag [#allocation9], %s486
        %s488 = sand.u32 %s178, 1
        %s489 = smul.addr %s488, 64
        %s490 = scalar_lea.vmem [#allocation8], %s489
        %p491 = pneg %p191
        %p492 = pneg %p188
        %p493 = scmp.lt.s32.totalorder %s29, 1
        %s494 = scalar_select %p493, %s29, 1
        %s495 = scalar_lea.vmem %s7, %s494
        %p496 = pneg %p217
        %p497 = pneg %p214
        %p498 = scmp.lt.s32.totalorder %s29, 1
        %s499 = scalar_select %p498, %s29, 1
        %s500 = scalar_lea.vmem %s8, %s499
        %p501 = pneg %p243
        %p502 = pneg %p240
        %p503 = scmp.lt.s32.totalorder %s29, 1
        %s504 = scalar_select %p503, %s29, 1
        %s505 = scalar_lea.vmem %s9, %s504
        %p506 = pneg %p269
        %p507 = pneg %p266
        %p508 = pneg %p290
        %p509 = pneg %p287
        %p510 = scmp.lt.s32.totalorder %s29, 1
        %s511 = scalar_select %p510, %s29, 1
        %s512 = scalar_lea.vmem %s5, %s511
        %p513 = scmp.lt.s32.totalorder %s29, 1
        %s514 = scalar_select %p513, %s29, 1
        %s515 = scalar_lea.vmem %s7, %s514
        %p516 = scmp.lt.s32.totalorder %s29, 1
        %s517 = scalar_select %p516, %s29, 1
        %s518 = scalar_lea.vmem %s8, %s517
        %p519 = scmp.lt.s32.totalorder %s29, 1
        %s520 = scalar_select %p519, %s29, 1
        %s521 = scalar_lea.vmem %s9, %s520
        %p522 = scmp.eq.s32.totalorder %s29, 0
        // Predicated region
        $region77: #{tpu_custom_call.1} parent=59 // pred_check
          %p523 = pneg %p522
        $region78: #{tpu_custom_call.1} parent=59 // pred_check_branch
          %525 = sbr.rel (%p523) target = $region80
        $region79: #{tpu_custom_call.1} parent=59 // pred_region
          %v526 = vld [vmem:[%s1] sm:$0xff]
          %v527 = vld [vmem:[%s1 + $0x8] sm:$0xff]
          %v528 = vld [vmem:[%s1 + $0x10] sm:$0xff]
          %v529 = vld [vmem:[%s1 + $0x18] sm:$0xff]
          %v530 = vld [vmem:[%s1 + $0x20] sm:$0xff]
          %v531 = vld [vmem:[%s1 + $0x28] sm:$0xff]
          %v532 = vld [vmem:[%s1 + $0x30] sm:$0xff]
          %v533 = vld [vmem:[%s1 + $0x38] sm:$0xff]
          %v534 = vld [vmem:[%s1 + $0x40] sm:$0xff]
          %v535 = vld [vmem:[%s1 + $0x48] sm:$0xff]
          %v536 = vld [vmem:[%s1 + $0x50] sm:$0xff]
          %v537 = vld [vmem:[%s1 + $0x58] sm:$0xff]
          %v538 = vld [vmem:[%s1 + $0x60] sm:$0xff]
          %v539 = vld [vmem:[%s1 + $0x68] sm:$0xff]
          %v540 = vld [vmem:[%s1 + $0x70] sm:$0xff]
          %v541 = vld [vmem:[%s1 + $0x78] sm:$0xff]
          %542 = vst [vmem:[#allocation10] sm:$0xff] %v526
          %543 = vst [vmem:[#allocation10 + $0x8] sm:$0xff] %v527
          %544 = vst [vmem:[#allocation10 + $0x10] sm:$0xff] %v528
          %545 = vst [vmem:[#allocation10 + $0x18] sm:$0xff] %v529
          %546 = vst [vmem:[#allocation10 + $0x20] sm:$0xff] %v530
          %547 = vst [vmem:[#allocation10 + $0x28] sm:$0xff] %v531
          %548 = vst [vmem:[#allocation10 + $0x30] sm:$0xff] %v532
          %549 = vst [vmem:[#allocation10 + $0x38] sm:$0xff] %v533
          %550 = vst [vmem:[#allocation10 + $0x40] sm:$0xff] %v534
          %551 = vst [vmem:[#allocation10 + $0x48] sm:$0xff] %v535
          %552 = vst [vmem:[#allocation10 + $0x50] sm:$0xff] %v536
          %553 = vst [vmem:[#allocation10 + $0x58] sm:$0xff] %v537
          %554 = vst [vmem:[#allocation10 + $0x60] sm:$0xff] %v538
          %555 = vst [vmem:[#allocation10 + $0x68] sm:$0xff] %v539
          %556 = vst [vmem:[#allocation10 + $0x70] sm:$0xff] %v540
          %557 = vst [vmem:[#allocation10 + $0x78] sm:$0xff] %v541
        $region80: #{tpu_custom_call.1} parent=59 // pred_fallthru
          _
        %v558 = vld [vmem:[#allocation10] sm:$0xff]
        %v559 = vld [vmem:[#allocation10 + $0x8] sm:$0xff]
        %v560 = vld [vmem:[#allocation10 + $0x10] sm:$0xff]
        %v561 = vld [vmem:[#allocation10 + $0x18] sm:$0xff]
        %v562 = vld [vmem:[#allocation10 + $0x20] sm:$0xff]
        %v563 = vld [vmem:[#allocation10 + $0x28] sm:$0xff]
        %v564 = vld [vmem:[#allocation10 + $0x30] sm:$0xff]
        %v565 = vld [vmem:[#allocation10 + $0x38] sm:$0xff]
        %v566 = vld [vmem:[#allocation10 + $0x40] sm:$0xff]
        %v567 = vld [vmem:[#allocation10 + $0x48] sm:$0xff]
        %v568 = vld [vmem:[#allocation10 + $0x50] sm:$0xff]
        %v569 = vld [vmem:[#allocation10 + $0x58] sm:$0xff]
        %v570 = vld [vmem:[#allocation10 + $0x60] sm:$0xff]
        %v571 = vld [vmem:[#allocation10 + $0x68] sm:$0xff]
        %v572 = vld [vmem:[#allocation10 + $0x70] sm:$0xff]
        %v573 = vld [vmem:[#allocation10 + $0x78] sm:$0xff]
        %v574 = vld [vmem:[#allocation2] sm:$0xf]
        %v575 = vld [vmem:[#allocation2 + $0x4] sm:$0xf]
        %v576 = vld [vmem:[#allocation2 + $0x8] sm:$0xf]
        %v577 = vld [vmem:[#allocation2 + $0xc] sm:$0xf]
        %v578 = vld [vmem:[#allocation2 + $0x10] sm:$0xf]
        %v579 = vld [vmem:[#allocation2 + $0x14] sm:$0xf]
        %v580 = vld [vmem:[#allocation2 + $0x18] sm:$0xf]
        %v581 = vld [vmem:[#allocation2 + $0x1c] sm:$0xf]
        %v582 = vld [vmem:[#allocation2 + $0x20] sm:$0xf]
        %v583 = vld [vmem:[#allocation2 + $0x24] sm:$0xf]
        %v584 = vld [vmem:[#allocation2 + $0x28] sm:$0xf]
        %v585 = vld [vmem:[#allocation2 + $0x2c] sm:$0xf]
        %v586 = vld [vmem:[#allocation2 + $0x30] sm:$0xf]
        %v587 = vld [vmem:[#allocation2 + $0x34] sm:$0xf]
        %v588 = vld [vmem:[#allocation2 + $0x38] sm:$0xf]
        %v589 = vld [vmem:[#allocation2 + $0x3c] sm:$0xf]
        %v590 = vpack.c.bf16 %v559, %v558
        %v591 = vpack.c.bf16 %v561, %v560
        %v592 = vpack.c.bf16 %v563, %v562
        %v593 = vpack.c.bf16 %v565, %v564
        %v594 = vpack.c.bf16 %v567, %v566
        %v595 = vpack.c.bf16 %v569, %v568
        %v596 = vpack.c.bf16 %v571, %v570
        %v597 = vpack.c.bf16 %v573, %v572
        %v598 = vld [vmem:[%s435] sm:$0xf]
        %v599 = vld [vmem:[%s435 + $0x4] sm:$0xf]
        %v600 = vld [vmem:[%s435 + $0x8] sm:$0xf]
        %v601 = vld [vmem:[%s435 + $0xc] sm:$0xf]
        %v602 = vld [vmem:[%s435 + $0x10] sm:$0xf]
        %v603 = vld [vmem:[%s435 + $0x14] sm:$0xf]
        %v604 = vld [vmem:[%s435 + $0x18] sm:$0xf]
        %v605 = vld [vmem:[%s435 + $0x1c] sm:$0xf]
        %v606 = vld [vmem:[%s435 + $0x20] sm:$0xf]
        %v607 = vld [vmem:[%s435 + $0x24] sm:$0xf]
        %v608 = vld [vmem:[%s435 + $0x28] sm:$0xf]
        %v609 = vld [vmem:[%s435 + $0x2c] sm:$0xf]
        %v610 = vld [vmem:[%s435 + $0x30] sm:$0xf]
        %v611 = vld [vmem:[%s435 + $0x34] sm:$0xf]
        %v612 = vld [vmem:[%s435 + $0x38] sm:$0xf]
        %v613 = vld [vmem:[%s435 + $0x3c] sm:$0xf]
        %v614 = vunpack.c.l.bf16 %v598
        %v615 = vunpack.c.l.bf16 %v599
        %v616 = vunpack.c.l.bf16 %v600
        %v617 = vunpack.c.l.bf16 %v601
        %v618 = vunpack.c.l.bf16 %v602
        %v619 = vunpack.c.l.bf16 %v603
        %v620 = vunpack.c.l.bf16 %v604
        %v621 = vunpack.c.l.bf16 %v605
        %v622 = vunpack.c.l.bf16 %v606
        %v623 = vunpack.c.l.bf16 %v607
        %v624 = vunpack.c.l.bf16 %v608
        %v625 = vunpack.c.l.bf16 %v609
        %v626 = vunpack.c.l.bf16 %v610
        %v627 = vunpack.c.l.bf16 %v611
        %v628 = vunpack.c.l.bf16 %v612
        %v629 = vunpack.c.l.bf16 %v613
        %v646 = vunpack.c.l.b16 %v574
        %v647 = vunpack.c.l.b16 %v575
        %v648 = vunpack.c.l.b16 %v576
        %v649 = vunpack.c.l.b16 %v577
        %v650 = vunpack.c.l.b16 %v578
        %v651 = vunpack.c.l.b16 %v579
        %v652 = vunpack.c.l.b16 %v580
        %v653 = vunpack.c.l.b16 %v581
        %v654 = vunpack.c.l.b16 %v582
        %v655 = vunpack.c.l.b16 %v583
        %v656 = vunpack.c.l.b16 %v584
        %v657 = vunpack.c.l.b16 %v585
        %v658 = vunpack.c.l.b16 %v586
        %v659 = vunpack.c.l.b16 %v587
        %v660 = vunpack.c.l.b16 %v588
        %v661 = vunpack.c.l.b16 %v589
        %v662 = vpack.c.b16 %v647, %v646
        %v663 = vpack.c.b16 %v649, %v648
        %v664 = vpack.c.b16 %v651, %v650
        %v665 = vpack.c.b16 %v653, %v652
        %v666 = vpack.c.b16 %v655, %v654
        %v667 = vpack.c.b16 %v657, %v656
        %v668 = vpack.c.b16 %v659, %v658
        %v669 = vpack.c.b16 %v661, %v660
        %678 = vmatpush.bf16.msra.mxu0 %v597
        %679 = vmatpush.bf16.msra.mxu0 %v596
        %680 = vmatpush.bf16.msra.mxu0 %v595
        %681 = vmatpush.bf16.msra.mxu0 %v594
        %682 = vmatpush.bf16.msra.mxu0 %v593
        %683 = vmatpush.bf16.msra.mxu0 %v592
        %684 = vmatpush.bf16.msra.mxu0 %v591
        %685 = vmatpush.bf16.msra.mxu0 %v590
        %686 = vmatmul.bf16.gmra.mxu0 %v662
        %v687 = vpop.f32.mrf.mxu0
        %v688 = vadd.f32 %v614, %v687
        %v689 = vpop.f32.mrf.mxu0
        %v690 = vadd.f32 %v615, %v689
        %691 = vmatmul.bf16.gmra.mxu0 %v663
        %v692 = vpop.f32.mrf.mxu0
        %v693 = vadd.f32 %v616, %v692
        %v694 = vpop.f32.mrf.mxu0
        %v695 = vadd.f32 %v617, %v694
        %696 = vmatmul.bf16.gmra.mxu0 %v664
        %v697 = vpop.f32.mrf.mxu0
        %v698 = vadd.f32 %v618, %v697
        %v699 = vpop.f32.mrf.mxu0
        %v700 = vadd.f32 %v619, %v699
        %701 = vmatmul.bf16.gmra.mxu0 %v665
        %v702 = vpop.f32.mrf.mxu0
        %v703 = vadd.f32 %v620, %v702
        %v704 = vpop.f32.mrf.mxu0
        %v705 = vadd.f32 %v621, %v704
        %706 = vmatmul.bf16.gmra.mxu0 %v666
        %v707 = vpop.f32.mrf.mxu0
        %v708 = vadd.f32 %v622, %v707
        %v709 = vpop.f32.mrf.mxu0
        %v710 = vadd.f32 %v623, %v709
        %711 = vmatmul.bf16.gmra.mxu0 %v667
        %v712 = vpop.f32.mrf.mxu0
        %v713 = vadd.f32 %v624, %v712
        %v714 = vpop.f32.mrf.mxu0
        %v715 = vadd.f32 %v625, %v714
        %716 = vmatmul.bf16.gmra.mxu0 %v668
        %v717 = vpop.f32.mrf.mxu0
        %v718 = vadd.f32 %v626, %v717
        %v719 = vpop.f32.mrf.mxu0
        %v720 = vadd.f32 %v627, %v719
        %721 = vmatmul.bf16.gmra.mxu0 %v669
        %v722 = vpop.f32.mrf.mxu0
        %v723 = vadd.f32 %v628, %v722
        %v724 = vpop.f32.mrf.mxu0
        %v725 = vadd.f32 %v629, %v724
        %726 = vdwg.mxu0
        %v727 = vpack.c.bf16 %v690, %v688
        %v728 = vpack.c.bf16 %v695, %v693
        %v729 = vpack.c.bf16 %v700, %v698
        %v730 = vpack.c.bf16 %v705, %v703
        %v731 = vpack.c.bf16 %v710, %v708
        %v732 = vpack.c.bf16 %v715, %v713
        %v733 = vpack.c.bf16 %v720, %v718
        %v734 = vpack.c.bf16 %v725, %v723
        %v735 = vld [vmem:[%s445] sm:$0xf]
        %v736 = vld [vmem:[%s445 + $0x4] sm:$0xf]
        %v737 = vld [vmem:[%s445 + $0x8] sm:$0xf]
        %v738 = vld [vmem:[%s445 + $0xc] sm:$0xf]
        %v739 = vld [vmem:[%s445 + $0x10] sm:$0xf]
        %v740 = vld [vmem:[%s445 + $0x14] sm:$0xf]
        %v741 = vld [vmem:[%s445 + $0x18] sm:$0xf]
        %v742 = vld [vmem:[%s445 + $0x1c] sm:$0xf]
        %v743 = vld [vmem:[%s445 + $0x20] sm:$0xf]
        %v744 = vld [vmem:[%s445 + $0x24] sm:$0xf]
        %v745 = vld [vmem:[%s445 + $0x28] sm:$0xf]
        %v746 = vld [vmem:[%s445 + $0x2c] sm:$0xf]
        %v747 = vld [vmem:[%s445 + $0x30] sm:$0xf]
        %v748 = vld [vmem:[%s445 + $0x34] sm:$0xf]
        %v749 = vld [vmem:[%s445 + $0x38] sm:$0xf]
        %v750 = vld [vmem:[%s445 + $0x3c] sm:$0xf]
        %v751 = vld [vmem:[%s512] sm:$0x1]
        %v753 = vperm.slane %v751, 0
        %v771 = vunpack.c.l.b16 %v735
        %v772 = vunpack.c.l.b16 %v736
        %v773 = vunpack.c.l.b16 %v737
        %v774 = vunpack.c.l.b16 %v738
        %v775 = vunpack.c.l.b16 %v739
        %v776 = vunpack.c.l.b16 %v740
        %v777 = vunpack.c.l.b16 %v741
        %v778 = vunpack.c.l.b16 %v742
        %v779 = vunpack.c.l.b16 %v743
        %v780 = vunpack.c.l.b16 %v744
        %v781 = vunpack.c.l.b16 %v745
        %v782 = vunpack.c.l.b16 %v746
        %v783 = vunpack.c.l.b16 %v747
        %v784 = vunpack.c.l.b16 %v748
        %v785 = vunpack.c.l.b16 %v749
        %v786 = vunpack.c.l.b16 %v750
        %v787 = vpack.c.b16 %v772, %v771
        %v788 = vpack.c.b16 %v774, %v773
        %v789 = vpack.c.b16 %v776, %v775
        %v790 = vpack.c.b16 %v778, %v777
        %v791 = vpack.c.b16 %v780, %v779
        %v792 = vpack.c.b16 %v782, %v781
        %v793 = vpack.c.b16 %v784, %v783
        %v794 = vpack.c.b16 %v786, %v785
        %803 = vmatpush.bf16.msra.mxu0 %v794
        %804 = vmatpush.bf16.msra.mxu0 %v793
        %805 = vmatpush.bf16.msra.mxu0 %v792
        %806 = vmatpush.bf16.msra.mxu0 %v791
        %807 = vmatpush.bf16.msra.mxu0 %v790
        %808 = vmatpush.bf16.msra.mxu0 %v789
        %809 = vmatpush.bf16.msra.mxu0 %v788
        %810 = vmatpush.bf16.msra.mxu0 %v787
        %811 = vmatmul.bf16.gmra.mxu0 %v727
        %v812 = vpop.f32.mrf.mxu0
        %v813 = vadd.f32 %v753, %v812
        %v814 = vpop.f32.mrf.mxu0
        %v815 = vadd.f32 %v753, %v814
        %816 = vmatmul.bf16.gmra.mxu0 %v728
        %v817 = vpop.f32.mrf.mxu0
        %v818 = vadd.f32 %v753, %v817
        %v819 = vpop.f32.mrf.mxu0
        %v820 = vadd.f32 %v753, %v819
        %821 = vmatmul.bf16.gmra.mxu0 %v729
        %v822 = vpop.f32.mrf.mxu0
        %v823 = vadd.f32 %v753, %v822
        %v824 = vpop.f32.mrf.mxu0
        %v825 = vadd.f32 %v753, %v824
        %826 = vmatmul.bf16.gmra.mxu0 %v730
        %v827 = vpop.f32.mrf.mxu0
        %v828 = vadd.f32 %v753, %v827
        %v829 = vpop.f32.mrf.mxu0
        %v830 = vadd.f32 %v753, %v829
        %831 = vmatmul.bf16.gmra.mxu0 %v731
        %v832 = vpop.f32.mrf.mxu0
        %v833 = vadd.f32 %v753, %v832
        %v834 = vpop.f32.mrf.mxu0
        %v835 = vadd.f32 %v753, %v834
        %836 = vmatmul.bf16.gmra.mxu0 %v732
        %v837 = vpop.f32.mrf.mxu0
        %v838 = vadd.f32 %v753, %v837
        %v839 = vpop.f32.mrf.mxu0
        %v840 = vadd.f32 %v753, %v839
        %841 = vmatmul.bf16.gmra.mxu0 %v733
        %v842 = vpop.f32.mrf.mxu0
        %v843 = vadd.f32 %v753, %v842
        %v844 = vpop.f32.mrf.mxu0
        %v845 = vadd.f32 %v753, %v844
        %846 = vmatmul.bf16.gmra.mxu0 %v734
        %v847 = vpop.f32.mrf.mxu0
        %v848 = vadd.f32 %v753, %v847
        %v849 = vpop.f32.mrf.mxu0
        %v850 = vadd.f32 %v753, %v849
        %851 = vdwg.mxu0
        %v852 = vmax.f32 %v813, 0.0
        %v853 = vmax.f32 %v815, 0.0
        %v854 = vmax.f32 %v818, 0.0
        %v855 = vmax.f32 %v820, 0.0
        %v856 = vmax.f32 %v823, 0.0
        %v857 = vmax.f32 %v825, 0.0
        %v858 = vmax.f32 %v828, 0.0
        %v859 = vmax.f32 %v830, 0.0
        %v860 = vmax.f32 %v833, 0.0
        %v861 = vmax.f32 %v835, 0.0
        %v862 = vmax.f32 %v838, 0.0
        %v863 = vmax.f32 %v840, 0.0
        %v864 = vmax.f32 %v843, 0.0
        %v865 = vmax.f32 %v845, 0.0
        %v866 = vmax.f32 %v848, 0.0
        %v867 = vmax.f32 %v850, 0.0
        %v868 = vpack.c.bf16 %v853, %v852
        %v869 = vpack.c.bf16 %v855, %v854
        %v870 = vpack.c.bf16 %v857, %v856
        %v871 = vpack.c.bf16 %v859, %v858
        %v872 = vpack.c.bf16 %v861, %v860
        %v873 = vpack.c.bf16 %v863, %v862
        %v874 = vpack.c.bf16 %v865, %v864
        %v875 = vpack.c.bf16 %v867, %v866
        %v876 = vld [vmem:[%s455] sm:$0xf]
        %v877 = vld [vmem:[%s455 + $0x4] sm:$0xf]
        %v878 = vld [vmem:[%s455 + $0x8] sm:$0xf]
        %v879 = vld [vmem:[%s455 + $0xc] sm:$0xf]
        %v880 = vld [vmem:[%s455 + $0x10] sm:$0xf]
        %v881 = vld [vmem:[%s455 + $0x14] sm:$0xf]
        %v882 = vld [vmem:[%s455 + $0x18] sm:$0xf]
        %v883 = vld [vmem:[%s455 + $0x1c] sm:$0xf]
        %v884 = vld [vmem:[%s455 + $0x20] sm:$0xf]
        %v885 = vld [vmem:[%s455 + $0x24] sm:$0xf]
        %v886 = vld [vmem:[%s455 + $0x28] sm:$0xf]
        %v887 = vld [vmem:[%s455 + $0x2c] sm:$0xf]
        %v888 = vld [vmem:[%s455 + $0x30] sm:$0xf]
        %v889 = vld [vmem:[%s455 + $0x34] sm:$0xf]
        %v890 = vld [vmem:[%s455 + $0x38] sm:$0xf]
        %v891 = vld [vmem:[%s455 + $0x3c] sm:$0xf]
        %v892 = vld [vmem:[%s515] sm:$0x1]
        %v894 = vperm.slane %v892, 0
        %v912 = vunpack.c.l.b16 %v876
        %v913 = vunpack.c.l.b16 %v877
        %v914 = vunpack.c.l.b16 %v878
        %v915 = vunpack.c.l.b16 %v879
        %v916 = vunpack.c.l.b16 %v880
        %v917 = vunpack.c.l.b16 %v881
        %v918 = vunpack.c.l.b16 %v882
        %v919 = vunpack.c.l.b16 %v883
        %v920 = vunpack.c.l.b16 %v884
        %v921 = vunpack.c.l.b16 %v885
        %v922 = vunpack.c.l.b16 %v886
        %v923 = vunpack.c.l.b16 %v887
        %v924 = vunpack.c.l.b16 %v888
        %v925 = vunpack.c.l.b16 %v889
        %v926 = vunpack.c.l.b16 %v890
        %v927 = vunpack.c.l.b16 %v891
        %v928 = vpack.c.b16 %v913, %v912
        %v929 = vpack.c.b16 %v915, %v914
        %v930 = vpack.c.b16 %v917, %v916
        %v931 = vpack.c.b16 %v919, %v918
        %v932 = vpack.c.b16 %v921, %v920
        %v933 = vpack.c.b16 %v923, %v922
        %v934 = vpack.c.b16 %v925, %v924
        %v935 = vpack.c.b16 %v927, %v926
        %944 = vmatpush.bf16.msra.mxu0 %v935
        %945 = vmatpush.bf16.msra.mxu0 %v934
        %946 = vmatpush.bf16.msra.mxu0 %v933
        %947 = vmatpush.bf16.msra.mxu0 %v932
        %948 = vmatpush.bf16.msra.mxu0 %v931
        %949 = vmatpush.bf16.msra.mxu0 %v930
        %950 = vmatpush.bf16.msra.mxu0 %v929
        %951 = vmatpush.bf16.msra.mxu0 %v928
        %952 = vmatmul.bf16.gmra.mxu0 %v868
        %v953 = vpop.f32.mrf.mxu0
        %v954 = vadd.f32 %v894, %v953
        %v955 = vpop.f32.mrf.mxu0
        %v956 = vadd.f32 %v894, %v955
        %957 = vmatmul.bf16.gmra.mxu0 %v869
        %v958 = vpop.f32.mrf.mxu0
        %v959 = vadd.f32 %v894, %v958
        %v960 = vpop.f32.mrf.mxu0
        %v961 = vadd.f32 %v894, %v960
        %962 = vmatmul.bf16.gmra.mxu0 %v870
        %v963 = vpop.f32.mrf.mxu0
        %v964 = vadd.f32 %v894, %v963
        %v965 = vpop.f32.mrf.mxu0
        %v966 = vadd.f32 %v894, %v965
        %967 = vmatmul.bf16.gmra.mxu0 %v871
        %v968 = vpop.f32.mrf.mxu0
        %v969 = vadd.f32 %v894, %v968
        %v970 = vpop.f32.mrf.mxu0
        %v971 = vadd.f32 %v894, %v970
        %972 = vmatmul.bf16.gmra.mxu0 %v872
        %v973 = vpop.f32.mrf.mxu0
        %v974 = vadd.f32 %v894, %v973
        %v975 = vpop.f32.mrf.mxu0
        %v976 = vadd.f32 %v894, %v975
        %977 = vmatmul.bf16.gmra.mxu0 %v873
        %v978 = vpop.f32.mrf.mxu0
        %v979 = vadd.f32 %v894, %v978
        %v980 = vpop.f32.mrf.mxu0
        %v981 = vadd.f32 %v894, %v980
        %982 = vmatmul.bf16.gmra.mxu0 %v874
        %v983 = vpop.f32.mrf.mxu0
        %v984 = vadd.f32 %v894, %v983
        %v985 = vpop.f32.mrf.mxu0
        %v986 = vadd.f32 %v894, %v985
        %987 = vmatmul.bf16.gmra.mxu0 %v875
        %v988 = vpop.f32.mrf.mxu0
        %v989 = vadd.f32 %v894, %v988
        %v990 = vpop.f32.mrf.mxu0
        %v991 = vadd.f32 %v894, %v990
        %992 = vdwg.mxu0
        %v993 = vld [vmem:[%s0] sm:$0xff]
        %v994 = vld [vmem:[%s0 + $0x8] sm:$0xff]
        %v995 = vld [vmem:[%s0 + $0x10] sm:$0xff]
        %v996 = vld [vmem:[%s0 + $0x18] sm:$0xff]
        %v997 = vld [vmem:[%s0 + $0x20] sm:$0xff]
        %v998 = vld [vmem:[%s0 + $0x28] sm:$0xff]
        %v999 = vld [vmem:[%s0 + $0x30] sm:$0xff]
        %v1000 = vld [vmem:[%s0 + $0x38] sm:$0xff]
        %v1001 = vld [vmem:[%s0 + $0x40] sm:$0xff]
        %v1002 = vld [vmem:[%s0 + $0x48] sm:$0xff]
        %v1003 = vld [vmem:[%s0 + $0x50] sm:$0xff]
        %v1004 = vld [vmem:[%s0 + $0x58] sm:$0xff]
        %v1005 = vld [vmem:[%s0 + $0x60] sm:$0xff]
        %v1006 = vld [vmem:[%s0 + $0x68] sm:$0xff]
        %v1007 = vld [vmem:[%s0 + $0x70] sm:$0xff]
        %v1008 = vld [vmem:[%s0 + $0x78] sm:$0xff]
        %1010 = vset.pattern.permute.xlu0 0
        %1011 = vperm.xlu0 %1010, %v993
        %v1012 = vpop.permute.xlu0 %1011
        %1015 = vset.pattern.permute.xlu0 0
        %1016 = vperm.xlu0 %1015, %v994
        %v1017 = vpop.permute.xlu0 %1016
        %1020 = vset.pattern.permute.xlu0 0
        %1021 = vperm.xlu0 %1020, %v995
        %v1022 = vpop.permute.xlu0 %1021
        %1025 = vset.pattern.permute.xlu0 0
        %1026 = vperm.xlu0 %1025, %v996
        %v1027 = vpop.permute.xlu0 %1026
        %1030 = vset.pattern.permute.xlu0 0
        %1031 = vperm.xlu0 %1030, %v997
        %v1032 = vpop.permute.xlu0 %1031
        %1035 = vset.pattern.permute.xlu0 0
        %1036 = vperm.xlu0 %1035, %v998
        %v1037 = vpop.permute.xlu0 %1036
        %1040 = vset.pattern.permute.xlu0 0
        %1041 = vperm.xlu0 %1040, %v999
        %v1042 = vpop.permute.xlu0 %1041
        %1045 = vset.pattern.permute.xlu0 0
        %1046 = vperm.xlu0 %1045, %v1000
        %v1047 = vpop.permute.xlu0 %1046
        %1050 = vset.pattern.permute.xlu0 0
        %1051 = vperm.xlu0 %1050, %v1001
        %v1052 = vpop.permute.xlu0 %1051
        %1055 = vset.pattern.permute.xlu0 0
        %1056 = vperm.xlu0 %1055, %v1002
        %v1057 = vpop.permute.xlu0 %1056
        %1060 = vset.pattern.permute.xlu0 0
        %1061 = vperm.xlu0 %1060, %v1003
        %v1062 = vpop.permute.xlu0 %1061
        %1065 = vset.pattern.permute.xlu0 0
        %1066 = vperm.xlu0 %1065, %v1004
        %v1067 = vpop.permute.xlu0 %1066
        %1070 = vset.pattern.permute.xlu0 0
        %1071 = vperm.xlu0 %1070, %v1005
        %v1072 = vpop.permute.xlu0 %1071
        %1075 = vset.pattern.permute.xlu0 0
        %1076 = vperm.xlu0 %1075, %v1006
        %v1077 = vpop.permute.xlu0 %1076
        %1080 = vset.pattern.permute.xlu0 0
        %1081 = vperm.xlu0 %1080, %v1007
        %v1082 = vpop.permute.xlu0 %1081
        %1085 = vset.pattern.permute.xlu0 0
        %1086 = vperm.xlu0 %1085, %v1008
        %v1087 = vpop.permute.xlu0 %1086
        %v1089 = vmul.f32 %v954, %v1012
        %v1090 = vmul.f32 %v956, %v1017
        %v1091 = vmul.f32 %v959, %v1022
        %v1092 = vmul.f32 %v961, %v1027
        %v1093 = vmul.f32 %v964, %v1032
        %v1094 = vmul.f32 %v966, %v1037
        %v1095 = vmul.f32 %v969, %v1042
        %v1096 = vmul.f32 %v971, %v1047
        %v1097 = vmul.f32 %v974, %v1052
        %v1098 = vmul.f32 %v976, %v1057
        %v1099 = vmul.f32 %v979, %v1062
        %v1100 = vmul.f32 %v981, %v1067
        %v1101 = vmul.f32 %v984, %v1072
        %v1102 = vmul.f32 %v986, %v1077
        %v1103 = vmul.f32 %v989, %v1082
        %v1104 = vmul.f32 %v991, %v1087
        %v1105 = vadd.f32 %v1089, %v1090
        %v1106 = vadd.f32 %v1105, %v1091
        %v1107 = vadd.f32 %v1106, %v1092
        %v1108 = vadd.f32 %v1107, %v1093
        %v1109 = vadd.f32 %v1108, %v1094
        %v1110 = vadd.f32 %v1109, %v1095
        %v1111 = vadd.f32 %v1110, %v1096
        %v1112 = vadd.f32 %v1111, %v1097
        %v1113 = vadd.f32 %v1112, %v1098
        %v1114 = vadd.f32 %v1113, %v1099
        %v1115 = vadd.f32 %v1114, %v1100
        %v1116 = vadd.f32 %v1115, %v1101
        %v1117 = vadd.f32 %v1116, %v1102
        %v1118 = vadd.f32 %v1117, %v1103
        %v1119 = vadd.f32 %v1118, %v1104
        %v1120 = vrot.slane %v1119, 4
        %v1121 = vadd.f32 %v1119, %v1120
        %v1122 = vrot.slane %v1121, 2
        %v1123 = vadd.f32 %v1121, %v1122
        %v1124 = vrot.slane %v1123, 1
        %v1125 = vadd.f32 %v1123, %v1124
        %v1126 = vmul.f32 %v1125, 0.0625
        %v1127 = vmul.f32 %v1089, %v954
        %v1128 = vmul.f32 %v1090, %v956
        %v1129 = vmul.f32 %v1091, %v959
        %v1130 = vmul.f32 %v1092, %v961
        %v1131 = vmul.f32 %v1093, %v964
        %v1132 = vmul.f32 %v1094, %v966
        %v1133 = vmul.f32 %v1095, %v969
        %v1134 = vmul.f32 %v1096, %v971
        %v1135 = vmul.f32 %v1097, %v974
        %v1136 = vmul.f32 %v1098, %v976
        %v1137 = vmul.f32 %v1099, %v979
        %v1138 = vmul.f32 %v1100, %v981
        %v1139 = vmul.f32 %v1101, %v984
        %v1140 = vmul.f32 %v1102, %v986
        %v1141 = vmul.f32 %v1103, %v989
        %v1142 = vmul.f32 %v1104, %v991
        %v1143 = vadd.f32 %v1127, %v1128
        %v1144 = vadd.f32 %v1143, %v1129
        %v1145 = vadd.f32 %v1144, %v1130
        %v1146 = vadd.f32 %v1145, %v1131
        %v1147 = vadd.f32 %v1146, %v1132
        %v1148 = vadd.f32 %v1147, %v1133
        %v1149 = vadd.f32 %v1148, %v1134
        %v1150 = vadd.f32 %v1149, %v1135
        %v1151 = vadd.f32 %v1150, %v1136
        %v1152 = vadd.f32 %v1151, %v1137
        %v1153 = vadd.f32 %v1152, %v1138
        %v1154 = vadd.f32 %v1153, %v1139
        %v1155 = vadd.f32 %v1154, %v1140
        %v1156 = vadd.f32 %v1155, %v1141
        %v1157 = vadd.f32 %v1156, %v1142
        %v1158 = vrot.slane %v1157, 4
        %v1159 = vadd.f32 %v1157, %v1158
        %v1160 = vrot.slane %v1159, 2
        %v1161 = vadd.f32 %v1159, %v1160
        %v1162 = vrot.slane %v1161, 1
        %v1163 = vadd.f32 %v1161, %v1162
        %v1164 = vmul.f32 %v1163, 0.0625
        %v1165 = vmul.f32 %v1126, %v1126
        %v1166 = vsub.f32 %v1164, %v1165
        %v1167 = vsub.f32 %v954, %v1126
        %v1168 = vsub.f32 %v956, %v1126
        %v1169 = vsub.f32 %v959, %v1126
        %v1170 = vsub.f32 %v961, %v1126
        %v1171 = vsub.f32 %v964, %v1126
        %v1172 = vsub.f32 %v966, %v1126
        %v1173 = vsub.f32 %v969, %v1126
        %v1174 = vsub.f32 %v971, %v1126
        %v1175 = vsub.f32 %v974, %v1126
        %v1176 = vsub.f32 %v976, %v1126
        %v1177 = vsub.f32 %v979, %v1126
        %v1178 = vsub.f32 %v981, %v1126
        %v1179 = vsub.f32 %v984, %v1126
        %v1180 = vsub.f32 %v986, %v1126
        %v1181 = vsub.f32 %v989, %v1126
        %v1182 = vsub.f32 %v991, %v1126
        %v1183 = vadd.f32 %v1166, 1e-05
        %v1184 = vrsqrt.pop %v1183
        %v1185 = vmul.f32 %v1184, %v1183
        %v1186 = vmul.f32 %v1185, %v1184
        %v1187 = vmul.f32 0.5, %v1186
        %v1188 = vsub.f32 1.5, %v1187
        %v1189 = vmul.f32 %v1184, %v1188
        %vm1190 = vweird.f32 %v1183
        %vm1191 = vweird.f32 %v1184
        %vm1192 = vmor %vm1190, %vm1191
        %v1193 = vsel %vm1192, %v1184, %v1189
        %v1194 = vmul.f32 %v1167, %v1193
        %v1195 = vmul.f32 %v1168, %v1193
        %v1196 = vmul.f32 %v1169, %v1193
        %v1197 = vmul.f32 %v1170, %v1193
        %v1198 = vmul.f32 %v1171, %v1193
        %v1199 = vmul.f32 %v1172, %v1193
        %v1200 = vmul.f32 %v1173, %v1193
        %v1201 = vmul.f32 %v1174, %v1193
        %v1202 = vmul.f32 %v1175, %v1193
        %v1203 = vmul.f32 %v1176, %v1193
        %v1204 = vmul.f32 %v1177, %v1193
        %v1205 = vmul.f32 %v1178, %v1193
        %v1206 = vmul.f32 %v1179, %v1193
        %v1207 = vmul.f32 %v1180, %v1193
        %v1208 = vmul.f32 %v1181, %v1193
        %v1209 = vmul.f32 %v1182, %v1193
        %v1210 = vld [vmem:[%s518] sm:$0x1]
        %v1212 = vperm.slane %v1210, 0
        %v1214 = vmul.f32 %v1194, %v1212
        %v1215 = vmul.f32 %v1195, %v1212
        %v1216 = vmul.f32 %v1196, %v1212
        %v1217 = vmul.f32 %v1197, %v1212
        %v1218 = vmul.f32 %v1198, %v1212
        %v1219 = vmul.f32 %v1199, %v1212
        %v1220 = vmul.f32 %v1200, %v1212
        %v1221 = vmul.f32 %v1201, %v1212
        %v1222 = vmul.f32 %v1202, %v1212
        %v1223 = vmul.f32 %v1203, %v1212
        %v1224 = vmul.f32 %v1204, %v1212
        %v1225 = vmul.f32 %v1205, %v1212
        %v1226 = vmul.f32 %v1206, %v1212
        %v1227 = vmul.f32 %v1207, %v1212
        %v1228 = vmul.f32 %v1208, %v1212
        %v1229 = vmul.f32 %v1209, %v1212
        %v1230 = vld [vmem:[%s521] sm:$0x1]
        %v1232 = vperm.slane %v1230, 0
        %v1234 = vadd.f32 %v1214, %v1232
        %v1235 = vadd.f32 %v1215, %v1232
        %v1236 = vadd.f32 %v1216, %v1232
        %v1237 = vadd.f32 %v1217, %v1232
        %v1238 = vadd.f32 %v1218, %v1232
        %v1239 = vadd.f32 %v1219, %v1232
        %v1240 = vadd.f32 %v1220, %v1232
        %v1241 = vadd.f32 %v1221, %v1232
        %v1242 = vadd.f32 %v1222, %v1232
        %v1243 = vadd.f32 %v1223, %v1232
        %v1244 = vadd.f32 %v1224, %v1232
        %v1245 = vadd.f32 %v1225, %v1232
        %v1246 = vadd.f32 %v1226, %v1232
        %v1247 = vadd.f32 %v1227, %v1232
        %v1248 = vadd.f32 %v1228, %v1232
        %v1249 = vadd.f32 %v1229, %v1232
        %p1250 = scmp.lt.s32.totalorder %s29, 1
        // Predicated region
        $region81: #{tpu_custom_call.1} parent=59 // pred_check
          %p1251 = pneg %p1250
        $region82: #{tpu_custom_call.1} parent=59 // pred_check_branch
          %1253 = sbr.rel (%p1251) target = $region84
        $region83: #{tpu_custom_call.1} parent=59 // pred_region
          %v1254 = vmax.f32 %v1234, 0.0
          %v1255 = vmax.f32 %v1235, 0.0
          %v1256 = vmax.f32 %v1236, 0.0
          %v1257 = vmax.f32 %v1237, 0.0
          %v1258 = vmax.f32 %v1238, 0.0
          %v1259 = vmax.f32 %v1239, 0.0
          %v1260 = vmax.f32 %v1240, 0.0
          %v1261 = vmax.f32 %v1241, 0.0
          %v1262 = vmax.f32 %v1242, 0.0
          %v1263 = vmax.f32 %v1243, 0.0
          %v1264 = vmax.f32 %v1244, 0.0
          %v1265 = vmax.f32 %v1245, 0.0
          %v1266 = vmax.f32 %v1246, 0.0
          %v1267 = vmax.f32 %v1247, 0.0
          %v1268 = vmax.f32 %v1248, 0.0
          %v1269 = vmax.f32 %v1249, 0.0
          %1270 = vst [vmem:[#allocation10] sm:$0xff] %v1254
          %1271 = vst [vmem:[#allocation10 + $0x8] sm:$0xff] %v1255
          %1272 = vst [vmem:[#allocation10 + $0x10] sm:$0xff] %v1256
          %1273 = vst [vmem:[#allocation10 + $0x18] sm:$0xff] %v1257
          %1274 = vst [vmem:[#allocation10 + $0x20] sm:$0xff] %v1258
          %1275 = vst [vmem:[#allocation10 + $0x28] sm:$0xff] %v1259
          %1276 = vst [vmem:[#allocation10 + $0x30] sm:$0xff] %v1260
          %1277 = vst [vmem:[#allocation10 + $0x38] sm:$0xff] %v1261
          %1278 = vst [vmem:[#allocation10 + $0x40] sm:$0xff] %v1262
          %1279 = vst [vmem:[#allocation10 + $0x48] sm:$0xff] %v1263
          %1280 = vst [vmem:[#allocation10 + $0x50] sm:$0xff] %v1264
          %1281 = vst [vmem:[#allocation10 + $0x58] sm:$0xff] %v1265
          %1282 = vst [vmem:[#allocation10 + $0x60] sm:$0xff] %v1266
          %1283 = vst [vmem:[#allocation10 + $0x68] sm:$0xff] %v1267
          %1284 = vst [vmem:[#allocation10 + $0x70] sm:$0xff] %v1268
          %1285 = vst [vmem:[#allocation10 + $0x78] sm:$0xff] %v1269
        $region84: #{tpu_custom_call.1} parent=59 // pred_fallthru
          _
        %p1286 = scmp.eq.s32.totalorder %s29, 1
        // Predicated region
        $region85: #{tpu_custom_call.1} parent=59 // pred_check
          %p1287 = pneg %p1286
        $region86: #{tpu_custom_call.1} parent=59 // pred_check_branch
          %1289 = sbr.rel (%p1287) target = $region88
        $region87: #{tpu_custom_call.1} parent=59 // pred_region
          %1290 = vst [vmem:[#allocation10] sm:$0xff] %v1234
          %1291 = vst [vmem:[#allocation10 + $0x8] sm:$0xff] %v1235
          %1292 = vst [vmem:[#allocation10 + $0x10] sm:$0xff] %v1236
          %1293 = vst [vmem:[#allocation10 + $0x18] sm:$0xff] %v1237
          %1294 = vst [vmem:[#allocation10 + $0x20] sm:$0xff] %v1238
          %1295 = vst [vmem:[#allocation10 + $0x28] sm:$0xff] %v1239
          %1296 = vst [vmem:[#allocation10 + $0x30] sm:$0xff] %v1240
          %1297 = vst [vmem:[#allocation10 + $0x38] sm:$0xff] %v1241
          %1298 = vst [vmem:[#allocation10 + $0x40] sm:$0xff] %v1242
          %1299 = vst [vmem:[#allocation10 + $0x48] sm:$0xff] %v1243
          %1300 = vst [vmem:[#allocation10 + $0x50] sm:$0xff] %v1244
          %1301 = vst [vmem:[#allocation10 + $0x58] sm:$0xff] %v1245
          %1302 = vst [vmem:[#allocation10 + $0x60] sm:$0xff] %v1246
          %1303 = vst [vmem:[#allocation10 + $0x68] sm:$0xff] %v1247
          %1304 = vst [vmem:[#allocation10 + $0x70] sm:$0xff] %v1248
          %1305 = vst [vmem:[#allocation10 + $0x78] sm:$0xff] %v1249
        $region88: #{tpu_custom_call.1} parent=59 // pred_fallthru
          _
        // Predicated region
        $region89: #{tpu_custom_call.1} parent=59 // pred_check
          %p1306 = pneg %p287
        $region90: #{tpu_custom_call.1} parent=59 // pred_check_branch
          %1308 = sbr.rel (%p1306) target = $region92
        $region91: #{tpu_custom_call.1} parent=59 // pred_region
          %1310 = vsyncadd [#allocation4], 0
          %s1311 = sshll.u32 [#allocation10], 4
          %s1312 = int_to_ptr.vmem [resolvable:$true] %s1311
          %s1313 = sshll.u32 %s10, 4
          %s1314 = int_to_ptr.hbm [resolvable:$true] %s1313
          %1319 = dma.vmem_to_hbm [thread:$0]  %s1312, 2048, %s1314, [#allocation4], 128, 128, 8
        $region92: #{tpu_custom_call.1} parent=59 // pred_fallthru
          _
        // Predicated region
        $region93: #{tpu_custom_call.1} parent=59 // pred_check
          %p1320 = pneg %p287
        $region94: #{tpu_custom_call.1} parent=59 // pred_check_branch
          %1322 = sbr.rel (%p1320) target = $region96
        $region95: #{tpu_custom_call.1} parent=59 // pred_region
          %1324 = dma.done [#allocation4], 2048
        $region96: #{tpu_custom_call.1} parent=59 // pred_fallthru
          _
      $region60: #{tpu_custom_call.1} parent=5 // pred_fallthru
        _
      %p1325 = scmp.le.s32.totalorder 2, %s24
      // Predicated region
      $region97: #{tpu_custom_call.1} parent=5 // pred_check
        %p1326 = pneg %p1325
      $region98: #{tpu_custom_call.1} parent=5 // pred_check_branch
        %1328 = sbr.rel (%p1326) target = $region100
      $region99: #{tpu_custom_call.1} parent=5 // pred_region
        %s1329 = ssub.s32 %s24, 2
      $region100: #{tpu_custom_call.1} parent=5 // pred_fallthru
        _
    $region6: #{tpu_custom_call.1} parent=1 // loop_footer
      %s28 = sadd.s32 1, %s24
    $region7: #{tpu_custom_call.1} parent=1 // loop_footer_branch
      %23 = sbr.rel target = $region3
    $region8: #{tpu_custom_call.1} parent=1 // loop_exit
      _
    %1330 = vsyncpa [#allocation3], 1
    %s1331 = scalar_lea.sflag [#allocation3], 1
    %1332 = vsyncpa %s1331, 1
    %1333 = vsyncpa [#allocation6], 1
    %s1334 = scalar_lea.sflag [#allocation6], 1
    %1335 = vsyncpa %s1334, 1
    %1336 = vsyncpa [#allocation9], 1
    %s1337 = scalar_lea.sflag [#allocation9], 1
    %1338 = vsyncpa %s1337, 1
    %1339 = vsyncpa [#allocation4], 1
    %s1340 = scalar_lea.sflag [#allocation4], 1
    %1341 = vsyncpa %s1340, 1

</llo_original>
